<compile_context>
chip_gen: v6e
topology: v6e:2x2x1
jax: 0.10.0
libtpu: 0.0.40
codegen_flags: <defaults>
</compile_context>

<pallas_src>
import functools

import jax
import jax.numpy as jnp
import numpy as np
from jax import lax
from jax.experimental import pallas as pl
from jax.experimental.pallas import tpu as pltpu


# ---------------------------------------------------------------------------
# Pallas kernel: full SSA forward for one batch element (one grid step).
# Internal layout: channels/features on sublanes, tokens on lanes.
# ---------------------------------------------------------------------------
def _ssa_kernel(x_ref, gamma_ref, beta_ref, wqkv_ref, wout_ref, bout_ref, o_ref,
                *, num_heads: int, dim_head: int, eps: float):
    inner = num_heads * dim_head
    C, X = x_ref.shape                 # (C, X) -- batch dim squeezed by BlockSpec

    # Hoisted loads (no re-materialized broadcasts inside the head loop).
    x = x_ref[...]                     # (C, X)  channels on sublanes, tokens on lanes
    gamma = gamma_ref[...]             # (C, 1)
    beta = beta_ref[...]               # (C, 1)
    b_out = bout_ref[...]              # (C, 1)
    w_qkv_t = wqkv_ref[...]            # (3*inner, C)  (Q rows pre-scaled by 1/sqrt(dh))
    w_out_t = wout_ref[...]            # (C, inner)

    # --- LayerNorm over channels (sublane axis), biased variance, eps in rsqrt
    mean = jnp.mean(x, axis=0, keepdims=True)                # (1, X)
    var = jnp.mean((x - mean) ** 2, axis=0, keepdims=True)   # (1, X)
    xn = (x - mean) * lax.rsqrt(var + eps) * gamma + beta    # (C, X)

    # --- QKV projection, transposed: one matmul, K=C, tokens stay on lanes ----
    qkv = jnp.dot(w_qkv_t, xn, preferred_element_type=jnp.float32)  # (3*inner, X)

    # --- Per-head attention.  Row order of qkv follows the PyTorch Rearrange
    #     '(qkv l n)': qkv slowest, head next, dim_head fastest, so each head is
    #     an aligned 8-sublane row tile (dh = 8).  No lane slicing anywhere.
    outs = []
    for h in range(num_heads):         # static loop, H=4: unrolled, interleavable
        r = h * dim_head
        q_t = qkv[r:r + dim_head, :]                             # (dh, X)
        k_t = qkv[inner + r:inner + r + dim_head, :]             # (dh, X)
        v_t = qkv[2 * inner + r:2 * inner + r + dim_head, :]     # (dh, X)

        # scores s[x, y] = sum_d q[x, d] * k[y, d]  (scale already in W_qkv).
        # One tiny (dh, X) -> (X, dh) XLU transpose keeps the matmul canonical.
        s = jnp.dot(q_t.T, k_t, preferred_element_type=jnp.float32)   # (X, X)

        # softmax over keys (lane axis); approx reciprocal runs on the EUP.
        p = jnp.exp(s - jnp.max(s, axis=-1, keepdims=True))
        p = p * pl.reciprocal(jnp.sum(p, axis=-1, keepdims=True), approx=True)

        # out_h^T[d, x] = sum_y v^T[d, y] * p[x, y]  (contract keys, K = X).
        outs.append(lax.dot_general(v_t, p, (((1,), (1,)), ((), ())),
                                    preferred_element_type=jnp.float32))  # (dh, X)

    # Sublane concat of aligned 8-row tiles (head-major order == '(l n)').
    att_t = jnp.concatenate(outs, axis=0)                        # (inner, X)

    # --- Single shared out-projection + bias + residual (pre-LN input) -------
    out = jnp.dot(w_out_t, att_t, preferred_element_type=jnp.float32)  # (C, X)
    o_ref[...] = out + b_out + x

    # TODO(synk): dropout (drop_weights / drop_output) is identity at eval /
    # dropout_rate=0.0 and is therefore omitted; save_attn buffer not exposed.
    # TODO(synk): for large img_size, flash-tile the KV axis (the (X, X) score
    # tile grows as (img_size/16)^6 and will hit v7x's 64 MiB VMEM first) and
    # consider bf16 matmul operands once compute-bound.


# ---------------------------------------------------------------------------
# Wrapper: no input/output relayouts -- NCDHW flattens straight to (B, C, X).
# ---------------------------------------------------------------------------
def ssa_forward(x, params, *, num_heads: int, dim_head: int, eps: float = 1e-5):
    """x: (B, C, D, H, W) float32. Returns same shape."""
    B, C, D, H, W = x.shape
    X = D * H * W
    inner = num_heads * dim_head
    scale = dim_head ** (-0.5)

    gamma, beta, w_qkv, w_out, b_out = params
    assert w_qkv.shape == (C, 3 * inner), w_qkv.shape
    assert w_out.shape == (inner, C), w_out.shape
    assert gamma.shape == (1, C) and beta.shape == (1, C) and b_out.shape == (1, C)

    # One-off parameter prep outside the kernel:
    #   * fold 1/sqrt(dim_head) into the Q columns of W_qkv,
    #   * pre-transpose weights / vectors into the channels-on-sublanes layout.
    col_scale = jnp.concatenate(
        [jnp.full((inner,), scale, jnp.float32), jnp.ones((2 * inner,), jnp.float32)])
    w_qkv_t = jnp.transpose(w_qkv * col_scale[None, :])   # (3*inner, C)
    w_out_t = jnp.transpose(w_out)                         # (C, inner)
    gamma_t = gamma.reshape(C, 1)
    beta_t = beta.reshape(C, 1)
    b_out_t = b_out.reshape(C, 1)

    x3 = x.reshape(B, C, X)                                # free reshape (NCDHW-native)

    kernel = functools.partial(
        _ssa_kernel, num_heads=num_heads, dim_head=dim_head, eps=eps)

    out3 = pl.pallas_call(
        kernel,
        out_shape=jax.ShapeDtypeStruct((B, C, X), jnp.float32),
        grid=(B,),
        in_specs=[
            pl.BlockSpec((None, C, X), lambda b: (b, 0, 0)),      # x (per batch)
            pl.BlockSpec((C, 1), lambda b: (0, 0)),               # ln gamma
            pl.BlockSpec((C, 1), lambda b: (0, 0)),               # ln beta
            pl.BlockSpec((3 * inner, C), lambda b: (0, 0)),       # W_qkv^T (Q pre-scaled)
            pl.BlockSpec((C, inner), lambda b: (0, 0)),           # W_out^T
            pl.BlockSpec((C, 1), lambda b: (0, 0)),               # b_out
        ],
        out_specs=pl.BlockSpec((None, C, X), lambda b: (b, 0, 0)),
        compiler_params=pltpu.CompilerParams(
            dimension_semantics=("parallel",)),                   # v7x: one batch per TC
    )(x3, gamma_t, beta_t, w_qkv_t, w_out_t, b_out_t)

    return out3.reshape(B, C, D, H, W)                     # free reshape


# ---------------------------------------------------------------------------
# Pure-JAX reference (mirrors the PyTorch forward exactly) for validation.
# ---------------------------------------------------------------------------
def ssa_reference(x, params, *, num_heads: int, dim_head: int, eps: float = 1e-5):
    gamma, beta, w_qkv, w_out, b_out = params
    B, C, D, H, W = x.shape
    X = D * H * W
    inner = num_heads * dim_head
    scale = dim_head ** (-0.5)

    x_seq = jnp.transpose(x, (0, 2, 3, 4, 1)).reshape(B, X, C)
    mean = jnp.mean(x_seq, axis=-1, keepdims=True)
    var = jnp.mean((x_seq - mean) ** 2, axis=-1, keepdims=True)
    xn = (x_seq - mean) / jnp.sqrt(var + eps) * gamma[0] + beta[0]

    qkv = xn @ w_qkv                                        # (B, X, 3*inner)
    qkv = qkv.reshape(B, X, 3, num_heads, dim_head)
    qkv = jnp.transpose(qkv, (2, 0, 3, 1, 4))               # (3, B, L, X, N)
    q, k, v = qkv[0], qkv[1], qkv[2]
    att = jax.nn.softmax(jnp.einsum('blxn,blyn->blxy', q, k) * scale, axis=-1)
    out = jnp.einsum('blxy,blyn->blxn', att, v)             # (B, L, X, N)
    out = jnp.transpose(out, (0, 2, 1, 3)).reshape(B, X, inner)
    out = out @ w_out + b_out[0]
    out = out.reshape(B, D, H, W, C).transpose(0, 4, 1, 2, 3)
    return out + x


# ---------------------------------------------------------------------------
if __name__ == "__main__":
    # Module hyper-parameters (small, consistent with SSA's __init__):
    hidden_size = 32
    img_size = 64          # -> d = h = w = img_size // 16 = 4
    num_heads = 4
    dim_head = hidden_size // num_heads      # 8
    inner = num_heads * dim_head             # 32
    B = 2
    D = H = W = img_size // 16               # 4
    C = hidden_size

    key = jax.random.PRNGKey(0)
    kx, kg, kb, kq, ko, kbo = jax.random.split(key, 6)

    x = jax.random.normal(kx, (B, C, D, H, W), dtype=jnp.float32)

    # Deterministic synthetic parameters.
    gamma = 1.0 + 0.1 * jax.random.normal(kg, (1, C), dtype=jnp.float32)     # LayerNorm weight
    beta = 0.1 * jax.random.normal(kb, (1, C), dtype=jnp.float32)            # LayerNorm bias
    w_qkv = 0.05 * jax.random.normal(kq, (C, 3 * inner), dtype=jnp.float32)  # qkv.weight^T
    w_out = 0.05 * jax.random.normal(ko, (inner, C), dtype=jnp.float32)      # out_proj.weight^T
    b_out = 0.05 * jax.random.normal(kbo, (1, C), dtype=jnp.float32)         # out_proj.bias

    params = (gamma, beta, w_qkv, w_out, b_out)

    out = ssa_forward(x, params, num_heads=num_heads, dim_head=dim_head)
    out = jax.block_until_ready(out)

    ref = ssa_reference(x, params, num_heads=num_heads, dim_head=dim_head)
    # Tolerance slightly looser than pure-f32 because the softmax denominator
    # uses the EUP approximate reciprocal (pl.reciprocal(..., approx=True)).
    np.testing.assert_allclose(np.asarray(out), np.asarray(ref), rtol=1e-3, atol=1e-3)

    print("KERNEL_OK")
</pallas_src>

<mosaic_0001>
module attributes {stable_mosaic.version = 11 : i64} {
  func.func @_ssa_kernel(%arg0: i32, %arg1: memref<1x32x64xf32, #tpu.memory_space<vmem>>, %arg2: memref<32x1xf32, #tpu.memory_space<vmem>>, %arg3: memref<32x1xf32, #tpu.memory_space<vmem>>, %arg4: memref<96x32xf32, #tpu.memory_space<vmem>>, %arg5: memref<32x32xf32, #tpu.memory_space<vmem>>, %arg6: memref<32x1xf32, #tpu.memory_space<vmem>>, %arg7: memref<1x32x64xf32, #tpu.memory_space<vmem>>) attributes {dimension_semantics = [#tpu.dimension_semantics<parallel>], iteration_bounds = array<i64: 2>, scalar_prefetch = 0 : i64, scratch_operands = 0 : i64, tpu.core_type = #tpu.core_type<tc>, window_params = [{transform_indices = @transform_0, window_bounds = array<i64: 1, 32, 64>}, {pipeline_mode = #tpu.pipeline_mode<synchronous>, transform_indices = @transform_1, window_bounds = array<i64: 32, 1>}, {pipeline_mode = #tpu.pipeline_mode<synchronous>, transform_indices = @transform_2, window_bounds = array<i64: 32, 1>}, {pipeline_mode = #tpu.pipeline_mode<synchronous>, transform_indices = @transform_3, window_bounds = array<i64: 96, 32>}, {pipeline_mode = #tpu.pipeline_mode<synchronous>, transform_indices = @transform_4, window_bounds = array<i64: 32, 32>}, {pipeline_mode = #tpu.pipeline_mode<synchronous>, transform_indices = @transform_5, window_bounds = array<i64: 32, 1>}, {transform_indices = @transform_6, window_bounds = array<i64: 1, 32, 64>}]} {
    %c0 = arith.constant 0 : index
    %c0_0 = arith.constant 0 : index
    %c0_1 = arith.constant 0 : index
    %0 = vector.load %arg1[%c0, %c0_0, %c0_1] : memref<1x32x64xf32, #tpu.memory_space<vmem>>, vector<1x32x64xf32>
    %1 = vector.shape_cast %0 : vector<1x32x64xf32> to vector<32x64xf32>
    %c0_2 = arith.constant 0 : index
    %c0_3 = arith.constant 0 : index
    %2 = vector.load %arg2[%c0_2, %c0_3] : memref<32x1xf32, #tpu.memory_space<vmem>>, vector<32x1xf32>
    %c0_4 = arith.constant 0 : index
    %c0_5 = arith.constant 0 : index
    %3 = vector.load %arg3[%c0_4, %c0_5] : memref<32x1xf32, #tpu.memory_space<vmem>>, vector<32x1xf32>
    %c0_6 = arith.constant 0 : index
    %c0_7 = arith.constant 0 : index
    %4 = vector.load %arg6[%c0_6, %c0_7] : memref<32x1xf32, #tpu.memory_space<vmem>>, vector<32x1xf32>
    %c0_8 = arith.constant 0 : index
    %c0_9 = arith.constant 0 : index
    %5 = vector.load %arg4[%c0_8, %c0_9] : memref<96x32xf32, #tpu.memory_space<vmem>>, vector<96x32xf32>
    %c0_10 = arith.constant 0 : index
    %c0_11 = arith.constant 0 : index
    %6 = vector.load %arg5[%c0_10, %c0_11] : memref<32x32xf32, #tpu.memory_space<vmem>>, vector<32x32xf32>
    %cst = arith.constant dense<0.000000e+00> : vector<64xf32>
    %7 = vector.multi_reduction <add>, %1, %cst [0] : vector<32x64xf32> to vector<64xf32>
    %8 = vector.shape_cast %7 : vector<64xf32> to vector<1x64xf32>
    %cst_12 = arith.constant 3.200000e+01 : f32
    %9 = vector.broadcast %cst_12 : f32 to vector<1x64xf32>
    %10 = arith.divf %8, %9 : vector<1x64xf32>
    %11 = vector.broadcast %10 : vector<1x64xf32> to vector<32x64xf32>
    %12 = arith.subf %1, %11 : vector<32x64xf32>
    %13 = arith.mulf %12, %12 : vector<32x64xf32>
    %cst_13 = arith.constant dense<0.000000e+00> : vector<64xf32>
    %14 = vector.multi_reduction <add>, %13, %cst_13 [0] : vector<32x64xf32> to vector<64xf32>
    %15 = vector.shape_cast %14 : vector<64xf32> to vector<1x64xf32>
    %cst_14 = arith.constant 3.200000e+01 : f32
    %16 = vector.broadcast %cst_14 : f32 to vector<1x64xf32>
    %17 = arith.divf %15, %16 : vector<1x64xf32>
    %18 = vector.broadcast %10 : vector<1x64xf32> to vector<32x64xf32>
    %19 = arith.subf %1, %18 : vector<32x64xf32>
    %cst_15 = arith.constant 9.99999974E-6 : f32
    %20 = vector.broadcast %cst_15 : f32 to vector<1x64xf32>
    %21 = arith.addf %17, %20 : vector<1x64xf32>
    %22 = math.rsqrt %21 : vector<1x64xf32>
    %23 = vector.broadcast %22 : vector<1x64xf32> to vector<32x64xf32>
    %24 = arith.mulf %19, %23 : vector<32x64xf32>
    %25 = vector.broadcast %2 : vector<32x1xf32> to vector<32x64xf32>
    %26 = arith.mulf %24, %25 : vector<32x64xf32>
    %27 = vector.broadcast %3 : vector<32x1xf32> to vector<32x64xf32>
    %28 = arith.addf %26, %27 : vector<32x64xf32>
    %cst_16 = arith.constant dense<0.000000e+00> : vector<96x64xf32>
    %29 = tpu.matmul %5, %28, %cst_16 {dimension_numbers = #tpu.dot_dimension_numbers<[1], [0], [0], [1], [0, 0, 1, 1], [], []>} : vector<96x32xf32>, vector<32x64xf32>, vector<96x64xf32> -> vector<96x64xf32>
    %30 = vector.extract_strided_slice %29 {offsets = [0, 0], sizes = [8, 64], strides = [1, 1]} : vector<96x64xf32> to vector<8x64xf32>
    %31 = vector.extract_strided_slice %29 {offsets = [32, 0], sizes = [8, 64], strides = [1, 1]} : vector<96x64xf32> to vector<8x64xf32>
    %32 = vector.extract_strided_slice %29 {offsets = [64, 0], sizes = [8, 64], strides = [1, 1]} : vector<96x64xf32> to vector<8x64xf32>
    %33 = tpu.transpose %30, [1, 0] : vector<8x64xf32> -> vector<64x8xf32>
    %cst_17 = arith.constant dense<0.000000e+00> : vector<64x64xf32>
    %34 = tpu.matmul %33, %31, %cst_17 {dimension_numbers = #tpu.dot_dimension_numbers<[1], [0], [0], [1], [0, 0, 1, 1], [], []>} : vector<64x8xf32>, vector<8x64xf32>, vector<64x64xf32> -> vector<64x64xf32>
    %cst_18 = arith.constant dense<0xFF800000> : vector<64xf32>
    %35 = vector.multi_reduction <maximumf>, %34, %cst_18 [1] : vector<64x64xf32> to vector<64xf32>
    %36 = vector.shape_cast %35 : vector<64xf32> to vector<64x1xf32>
    %37 = vector.broadcast %36 : vector<64x1xf32> to vector<64x64xf32>
    %38 = arith.subf %34, %37 : vector<64x64xf32>
    %39 = math.exp %38 : vector<64x64xf32>
    %cst_19 = arith.constant dense<0.000000e+00> : vector<64xf32>
    %40 = vector.multi_reduction <add>, %39, %cst_19 [1] : vector<64x64xf32> to vector<64xf32>
    %41 = vector.shape_cast %40 : vector<64xf32> to vector<64x1xf32>
    %42 = tpu.reciprocal %41 {approx = true} : vector<64x1xf32> -> vector<64x1xf32>
    %43 = vector.broadcast %42 : vector<64x1xf32> to vector<64x64xf32>
    %44 = arith.mulf %39, %43 : vector<64x64xf32>
    %cst_20 = arith.constant dense<0.000000e+00> : vector<8x64xf32>
    %45 = tpu.matmul %32, %44, %cst_20 {dimension_numbers = #tpu.dot_dimension_numbers<[1], [1], [0], [0], [0, 0, 1, 0], [], []>} : vector<8x64xf32>, vector<64x64xf32>, vector<8x64xf32> -> vector<8x64xf32>
    %46 = vector.extract_strided_slice %29 {offsets = [8, 0], sizes = [8, 64], strides = [1, 1]} : vector<96x64xf32> to vector<8x64xf32>
    %47 = vector.extract_strided_slice %29 {offsets = [40, 0], sizes = [8, 64], strides = [1, 1]} : vector<96x64xf32> to vector<8x64xf32>
    %48 = vector.extract_strided_slice %29 {offsets = [72, 0], sizes = [8, 64], strides = [1, 1]} : vector<96x64xf32> to vector<8x64xf32>
    %49 = tpu.transpose %46, [1, 0] : vector<8x64xf32> -> vector<64x8xf32>
    %cst_21 = arith.constant dense<0.000000e+00> : vector<64x64xf32>
    %50 = tpu.matmul %49, %47, %cst_21 {dimension_numbers = #tpu.dot_dimension_numbers<[1], [0], [0], [1], [0, 0, 1, 1], [], []>} : vector<64x8xf32>, vector<8x64xf32>, vector<64x64xf32> -> vector<64x64xf32>
    %cst_22 = arith.constant dense<0xFF800000> : vector<64xf32>
    %51 = vector.multi_reduction <maximumf>, %50, %cst_22 [1] : vector<64x64xf32> to vector<64xf32>
    %52 = vector.shape_cast %51 : vector<64xf32> to vector<64x1xf32>
    %53 = vector.broadcast %52 : vector<64x1xf32> to vector<64x64xf32>
    %54 = arith.subf %50, %53 : vector<64x64xf32>
    %55 = math.exp %54 : vector<64x64xf32>
    %cst_23 = arith.constant dense<0.000000e+00> : vector<64xf32>
    %56 = vector.multi_reduction <add>, %55, %cst_23 [1] : vector<64x64xf32> to vector<64xf32>
    %57 = vector.shape_cast %56 : vector<64xf32> to vector<64x1xf32>
    %58 = tpu.reciprocal %57 {approx = true} : vector<64x1xf32> -> vector<64x1xf32>
    %59 = vector.broadcast %58 : vector<64x1xf32> to vector<64x64xf32>
    %60 = arith.mulf %55, %59 : vector<64x64xf32>
    %cst_24 = arith.constant dense<0.000000e+00> : vector<8x64xf32>
    %61 = tpu.matmul %48, %60, %cst_24 {dimension_numbers = #tpu.dot_dimension_numbers<[1], [1], [0], [0], [0, 0, 1, 0], [], []>} : vector<8x64xf32>, vector<64x64xf32>, vector<8x64xf32> -> vector<8x64xf32>
    %62 = vector.extract_strided_slice %29 {offsets = [16, 0], sizes = [8, 64], strides = [1, 1]} : vector<96x64xf32> to vector<8x64xf32>
    %63 = vector.extract_strided_slice %29 {offsets = [48, 0], sizes = [8, 64], strides = [1, 1]} : vector<96x64xf32> to vector<8x64xf32>
    %64 = vector.extract_strided_slice %29 {offsets = [80, 0], sizes = [8, 64], strides = [1, 1]} : vector<96x64xf32> to vector<8x64xf32>
    %65 = tpu.transpose %62, [1, 0] : vector<8x64xf32> -> vector<64x8xf32>
    %cst_25 = arith.constant dense<0.000000e+00> : vector<64x64xf32>
    %66 = tpu.matmul %65, %63, %cst_25 {dimension_numbers = #tpu.dot_dimension_numbers<[1], [0], [0], [1], [0, 0, 1, 1], [], []>} : vector<64x8xf32>, vector<8x64xf32>, vector<64x64xf32> -> vector<64x64xf32>
    %cst_26 = arith.constant dense<0xFF800000> : vector<64xf32>
    %67 = vector.multi_reduction <maximumf>, %66, %cst_26 [1] : vector<64x64xf32> to vector<64xf32>
    %68 = vector.shape_cast %67 : vector<64xf32> to vector<64x1xf32>
    %69 = vector.broadcast %68 : vector<64x1xf32> to vector<64x64xf32>
    %70 = arith.subf %66, %69 : vector<64x64xf32>
    %71 = math.exp %70 : vector<64x64xf32>
    %cst_27 = arith.constant dense<0.000000e+00> : vector<64xf32>
    %72 = vector.multi_reduction <add>, %71, %cst_27 [1] : vector<64x64xf32> to vector<64xf32>
    %73 = vector.shape_cast %72 : vector<64xf32> to vector<64x1xf32>
    %74 = tpu.reciprocal %73 {approx = true} : vector<64x1xf32> -> vector<64x1xf32>
    %75 = vector.broadcast %74 : vector<64x1xf32> to vector<64x64xf32>
    %76 = arith.mulf %71, %75 : vector<64x64xf32>
    %cst_28 = arith.constant dense<0.000000e+00> : vector<8x64xf32>
    %77 = tpu.matmul %64, %76, %cst_28 {dimension_numbers = #tpu.dot_dimension_numbers<[1], [1], [0], [0], [0, 0, 1, 0], [], []>} : vector<8x64xf32>, vector<64x64xf32>, vector<8x64xf32> -> vector<8x64xf32>
    %78 = vector.extract_strided_slice %29 {offsets = [24, 0], sizes = [8, 64], strides = [1, 1]} : vector<96x64xf32> to vector<8x64xf32>
    %79 = vector.extract_strided_slice %29 {offsets = [56, 0], sizes = [8, 64], strides = [1, 1]} : vector<96x64xf32> to vector<8x64xf32>
    %80 = vector.extract_strided_slice %29 {offsets = [88, 0], sizes = [8, 64], strides = [1, 1]} : vector<96x64xf32> to vector<8x64xf32>
    %81 = tpu.transpose %78, [1, 0] : vector<8x64xf32> -> vector<64x8xf32>
    %cst_29 = arith.constant dense<0.000000e+00> : vector<64x64xf32>
    %82 = tpu.matmul %81, %79, %cst_29 {dimension_numbers = #tpu.dot_dimension_numbers<[1], [0], [0], [1], [0, 0, 1, 1], [], []>} : vector<64x8xf32>, vector<8x64xf32>, vector<64x64xf32> -> vector<64x64xf32>
    %cst_30 = arith.constant dense<0xFF800000> : vector<64xf32>
    %83 = vector.multi_reduction <maximumf>, %82, %cst_30 [1] : vector<64x64xf32> to vector<64xf32>
    %84 = vector.shape_cast %83 : vector<64xf32> to vector<64x1xf32>
    %85 = vector.broadcast %84 : vector<64x1xf32> to vector<64x64xf32>
    %86 = arith.subf %82, %85 : vector<64x64xf32>
    %87 = math.exp %86 : vector<64x64xf32>
    %cst_31 = arith.constant dense<0.000000e+00> : vector<64xf32>
    %88 = vector.multi_reduction <add>, %87, %cst_31 [1] : vector<64x64xf32> to vector<64xf32>
    %89 = vector.shape_cast %88 : vector<64xf32> to vector<64x1xf32>
    %90 = tpu.reciprocal %89 {approx = true} : vector<64x1xf32> -> vector<64x1xf32>
    %91 = vector.broadcast %90 : vector<64x1xf32> to vector<64x64xf32>
    %92 = arith.mulf %87, %91 : vector<64x64xf32>
    %cst_32 = arith.constant dense<0.000000e+00> : vector<8x64xf32>
    %93 = tpu.matmul %80, %92, %cst_32 {dimension_numbers = #tpu.dot_dimension_numbers<[1], [1], [0], [0], [0, 0, 1, 0], [], []>} : vector<8x64xf32>, vector<64x64xf32>, vector<8x64xf32> -> vector<8x64xf32>
    %94 = tpu.concatenate %45, %61, %77, %93 in 0 : vector<8x64xf32>, vector<8x64xf32>, vector<8x64xf32>, vector<8x64xf32> -> vector<32x64xf32>
    %cst_33 = arith.constant dense<0.000000e+00> : vector<32x64xf32>
    %95 = tpu.matmul %6, %94, %cst_33 {dimension_numbers = #tpu.dot_dimension_numbers<[1], [0], [0], [1], [0, 0, 1, 1], [], []>} : vector<32x32xf32>, vector<32x64xf32>, vector<32x64xf32> -> vector<32x64xf32>
    %96 = vector.broadcast %4 : vector<32x1xf32> to vector<32x64xf32>
    %97 = arith.addf %95, %96 : vector<32x64xf32>
    %98 = arith.addf %97, %1 : vector<32x64xf32>
    %c0_34 = arith.constant 0 : index
    %c0_35 = arith.constant 0 : index
    %c0_36 = arith.constant 0 : index
    %99 = vector.load %arg7[%c0_34, %c0_35, %c0_36] : memref<1x32x64xf32, #tpu.memory_space<vmem>>, vector<1x32x64xf32>
    %100 = vector.shape_cast %99 : vector<1x32x64xf32> to vector<32x64xf32>
    %101 = vector.shape_cast %98 : vector<32x64xf32> to vector<1x32x64xf32>
    tpu.vector_store %arg7[%c0_34, %c0_35, %c0_36], %101 {strides = array<i32>} : memref<1x32x64xf32, #tpu.memory_space<vmem>>, vector<1x32x64xf32>,
    return
  }
  func.func @transform_0(%arg0: i32) -> (i32, i32, i32) {
    %c0_i32 = arith.constant 0 : i32
    %c0_i32_0 = arith.constant 0 : i32
    %c0_i32_1 = arith.constant 0 : i32
    return %arg0, %c0_i32, %c0_i32_0 : i32, i32, i32
  }
  func.func @transform_1(%arg0: i32) -> (i32, i32) {
    %c0_i32 = arith.constant 0 : i32
    %c0_i32_0 = arith.constant 0 : i32
    %c0_i32_1 = arith.constant 0 : i32
    return %c0_i32, %c0_i32_0 : i32, i32
  }
  func.func @transform_2(%arg0: i32) -> (i32, i32) {
    %c0_i32 = arith.constant 0 : i32
    %c0_i32_0 = arith.constant 0 : i32
    %c0_i32_1 = arith.constant 0 : i32
    return %c0_i32, %c0_i32_0 : i32, i32
  }
  func.func @transform_3(%arg0: i32) -> (i32, i32) {
    %c0_i32 = arith.constant 0 : i32
    %c0_i32_0 = arith.constant 0 : i32
    %c0_i32_1 = arith.constant 0 : i32
    return %c0_i32, %c0_i32_0 : i32, i32
  }
  func.func @transform_4(%arg0: i32) -> (i32, i32) {
    %c0_i32 = arith.constant 0 : i32
    %c0_i32_0 = arith.constant 0 : i32
    %c0_i32_1 = arith.constant 0 : i32
    return %c0_i32, %c0_i32_0 : i32, i32
  }
  func.func @transform_5(%arg0: i32) -> (i32, i32) {
    %c0_i32 = arith.constant 0 : i32
    %c0_i32_0 = arith.constant 0 : i32
    %c0_i32_1 = arith.constant 0 : i32
    return %c0_i32, %c0_i32_0 : i32, i32
  }
  func.func @transform_6(%arg0: i32) -> (i32, i32, i32) {
    %c0_i32 = arith.constant 0 : i32
    %c0_i32_0 = arith.constant 0 : i32
    %c0_i32_1 = arith.constant 0 : i32
    return %arg0, %c0_i32, %c0_i32_0 : i32, i32, i32
  }
}

</mosaic_0001>

<llo_original>
// kernel: tpu_custom_call.1
$region0: #{tpu_custom_call.1}
  #allocation0 [shape = 'u32[]', space=smem, size = 0x4, offset = 0x4, fixed_abs, tag = 'smem constant byte address 0x4 - core index']
  #allocation1 [shape = 'u32[144,128]{1,0:T(1,128)}', space=vmem, size = 0x12000, scoped, tag = 'internal scratch']
  %s0 = inlined_call_operand.vmem [shape: f32[2,32,64], index: 0, kind: input, shape index: {}]
  %s1 = inlined_call_operand.vmem [shape: f32[32,1], index: 1, kind: input, shape index: {}]
  %s2 = inlined_call_operand.vmem [shape: f32[32,1], index: 2, kind: input, shape index: {}]
  %s3 = inlined_call_operand.vmem [shape: f32[96,32], index: 3, kind: input, shape index: {}]
  %s4 = inlined_call_operand.vmem [shape: f32[32,32], index: 4, kind: input, shape index: {}]
  %s5 = inlined_call_operand.vmem [shape: f32[32,1], index: 5, kind: input, shape index: {}]
  %s6 = inlined_call_operand.hbm [shape: f32[2,32,64], index: 6, kind: output, shape index: {}]
  %s7 = sld [smem:[#allocation0]]
  $region57: #{tpu_custom_call.1} parent=0
    _
  %s9 = ssub.s32 1, %s7
  %s10 = scalar_select 0, %s9, %s7
  $region1: #{tpu_custom_call.1} parent=0
    #allocation2 [shape = 'u8[32768]{0}', space=vmem, size = 0x8000, scoped, tag = 'output window, operand 0']
    #allocation3 [shape = 's32[2]{0}', space=sflag, size = 0x8, scoped, tag = 'scoped memory for tpu_custom_call.1']
    %11 = vsyncpa [#allocation3], 0
    %s12 = scalar_lea.sflag [#allocation3], 1
    %13 = vsyncpa %s12, 0
    loop: start=0, step=1, limit=4
    $region2: #{tpu_custom_call.1} parent=1 // loop_pre_header
      _
    $region3: #{tpu_custom_call.1} parent=1 // loop_header
      %s15 = sphi 0, %s19
      %p16 = scmp.ge.s32.totalorder %s15, 4
      %s25 = sphi 0, %s27
      %s28 = sphi 0, %s25
      %s29 = sphi 0, %s28
      %s45 = sphi 0, %s29
      %s49 = sphi 0, %s49
      %s51 = sphi 0, %s49
      %s52 = sphi 0, %s51
      %s66 = sphi 0, %s52
      %s70 = sphi 0, %s70
      %s72 = sphi 0, %s70
      %s73 = sphi 0, %s72
      %s87 = sphi 0, %s73
      %s91 = sphi 0, %s91
      %s93 = sphi 0, %s91
      %s94 = sphi 0, %s93
      %s108 = sphi 0, %s94
      %s112 = sphi 0, %s112
      %s114 = sphi 0, %s112
      %s115 = sphi 0, %s114
      %s129 = sphi 0, %s115
      %s133 = sphi 0, %s133
      %s135 = sphi 0, %s133
      %s136 = sphi 0, %s135
      %s150 = sphi 0, %s136
      %s156 = sphi 0, %s158
      %s159 = sphi 0, %s156
      %s160 = sphi 0, %s159
      %s176 = sphi 0, %s160
    $region4: #{tpu_custom_call.1} parent=1 // loop_header_branch
      %18 = sbr.rel (%p16) target = $region8
    $region5: #{tpu_custom_call.1} parent=1 // loop_body
      %s20 = ssub.s32 %s15, 1
      %s21 = ssub.s32 %s15, 2
      %s22 = sadd.s32 %s15, 1
      %s23 = ssub.s32 %s15, %s22
      %p24 = scmp.eq.s32.totalorder %s23, 0
      %s26 = sadd.s32 %s25, 1
      %s27 = scalar_select %p24, %s25, %s26
      %p30 = pneg %p24
      %p31 = scmp.eq.s32.totalorder %s15, 1
      %p32 = por %p30, %p31
      %p33 = scmp.ne.s32.totalorder %s25, %s28
      %p34 = scmp.eq.s32.totalorder %s15, 0
      %p35 = por %p33, %p34
      %p36 = scmp.ne.s32.totalorder %s25, %s28
      %p37 = scmp.eq.s32.totalorder %s20, 1
      %p38 = por %p36, %p37
      %p39 = scmp.ne.s32.totalorder %s28, %s29
      %p40 = scmp.eq.s32.totalorder %s20, 0
      %p41 = por %p39, %p40
      %p42 = scmp.ne.s32.totalorder %s28, %s29
      %p43 = scmp.eq.s32.totalorder %s21, 1
      %p44 = por %p42, %p43
      %p46 = scmp.ne.s32.totalorder %s29, %s45
      %p47 = scmp.eq.s32.totalorder %s21, 0
      %p48 = por %p46, %p47
      %s50 = sadd.s32 %s49, 1
      %p53 = scmp.eq.s32.totalorder %s15, 1
      %p54 = scmp.ne.s32.totalorder %s49, %s51
      %p55 = scmp.eq.s32.totalorder %s15, 0
      %p56 = por %p54, %p55
      %p57 = scmp.ne.s32.totalorder %s49, %s51
      %p58 = scmp.eq.s32.totalorder %s20, 1
      %p59 = por %p57, %p58
      %p60 = scmp.ne.s32.totalorder %s51, %s52
      %p61 = scmp.eq.s32.totalorder %s20, 0
      %p62 = por %p60, %p61
      %p63 = scmp.ne.s32.totalorder %s51, %s52
      %p64 = scmp.eq.s32.totalorder %s21, 1
      %p65 = por %p63, %p64
      %p67 = scmp.ne.s32.totalorder %s52, %s66
      %p68 = scmp.eq.s32.totalorder %s21, 0
      %p69 = por %p67, %p68
      %s71 = sadd.s32 %s70, 1
      %p74 = scmp.eq.s32.totalorder %s15, 1
      %p75 = scmp.ne.s32.totalorder %s70, %s72
      %p76 = scmp.eq.s32.totalorder %s15, 0
      %p77 = por %p75, %p76
      %p78 = scmp.ne.s32.totalorder %s70, %s72
      %p79 = scmp.eq.s32.totalorder %s20, 1
      %p80 = por %p78, %p79
      %p81 = scmp.ne.s32.totalorder %s72, %s73
      %p82 = scmp.eq.s32.totalorder %s20, 0
      %p83 = por %p81, %p82
      %p84 = scmp.ne.s32.totalorder %s72, %s73
      %p85 = scmp.eq.s32.totalorder %s21, 1
      %p86 = por %p84, %p85
      %p88 = scmp.ne.s32.totalorder %s73, %s87
      %p89 = scmp.eq.s32.totalorder %s21, 0
      %p90 = por %p88, %p89
      %s92 = sadd.s32 %s91, 1
      %p95 = scmp.eq.s32.totalorder %s15, 1
      %p96 = scmp.ne.s32.totalorder %s91, %s93
      %p97 = scmp.eq.s32.totalorder %s15, 0
      %p98 = por %p96, %p97
      %p99 = scmp.ne.s32.totalorder %s91, %s93
      %p100 = scmp.eq.s32.totalorder %s20, 1
      %p101 = por %p99, %p100
      %p102 = scmp.ne.s32.totalorder %s93, %s94
      %p103 = scmp.eq.s32.totalorder %s20, 0
      %p104 = por %p102, %p103
      %p105 = scmp.ne.s32.totalorder %s93, %s94
      %p106 = scmp.eq.s32.totalorder %s21, 1
      %p107 = por %p105, %p106
      %p109 = scmp.ne.s32.totalorder %s94, %s108
      %p110 = scmp.eq.s32.totalorder %s21, 0
      %p111 = por %p109, %p110
      %s113 = sadd.s32 %s112, 1
      %p116 = scmp.eq.s32.totalorder %s15, 1
      %p117 = scmp.ne.s32.totalorder %s112, %s114
      %p118 = scmp.eq.s32.totalorder %s15, 0
      %p119 = por %p117, %p118
      %p120 = scmp.ne.s32.totalorder %s112, %s114
      %p121 = scmp.eq.s32.totalorder %s20, 1
      %p122 = por %p120, %p121
      %p123 = scmp.ne.s32.totalorder %s114, %s115
      %p124 = scmp.eq.s32.totalorder %s20, 0
      %p125 = por %p123, %p124
      %p126 = scmp.ne.s32.totalorder %s114, %s115
      %p127 = scmp.eq.s32.totalorder %s21, 1
      %p128 = por %p126, %p127
      %p130 = scmp.ne.s32.totalorder %s115, %s129
      %p131 = scmp.eq.s32.totalorder %s21, 0
      %p132 = por %p130, %p131
      %s134 = sadd.s32 %s133, 1
      %p137 = scmp.eq.s32.totalorder %s15, 1
      %p138 = scmp.ne.s32.totalorder %s133, %s135
      %p139 = scmp.eq.s32.totalorder %s15, 0
      %p140 = por %p138, %p139
      %p141 = scmp.ne.s32.totalorder %s133, %s135
      %p142 = scmp.eq.s32.totalorder %s20, 1
      %p143 = por %p141, %p142
      %p144 = scmp.ne.s32.totalorder %s135, %s136
      %p145 = scmp.eq.s32.totalorder %s20, 0
      %p146 = por %p144, %p145
      %p147 = scmp.ne.s32.totalorder %s135, %s136
      %p148 = scmp.eq.s32.totalorder %s21, 1
      %p149 = por %p147, %p148
      %p151 = scmp.ne.s32.totalorder %s136, %s150
      %p152 = scmp.eq.s32.totalorder %s21, 0
      %p153 = por %p151, %p152
      %s154 = ssub.s32 %s15, %s22
      %p155 = scmp.eq.s32.totalorder %s154, 0
      %s157 = sadd.s32 %s156, 1
      %s158 = scalar_select %p155, %s156, %s157
      %p161 = pneg %p155
      %p162 = scmp.eq.s32.totalorder %s15, 1
      %p163 = por %p161, %p162
      %p164 = scmp.ne.s32.totalorder %s156, %s159
      %p165 = scmp.eq.s32.totalorder %s15, 0
      %p166 = por %p164, %p165
      %p167 = scmp.ne.s32.totalorder %s156, %s159
      %p168 = scmp.eq.s32.totalorder %s20, 1
      %p169 = por %p167, %p168
      %p170 = scmp.ne.s32.totalorder %s159, %s160
      %p171 = scmp.eq.s32.totalorder %s20, 0
      %p172 = por %p170, %p171
      %p173 = scmp.ne.s32.totalorder %s159, %s160
      %p174 = scmp.eq.s32.totalorder %s21, 1
      %p175 = por %p173, %p174
      %p177 = scmp.ne.s32.totalorder %s160, %s176
      %p178 = scmp.eq.s32.totalorder %s21, 0
      %p179 = por %p177, %p178
      %p180 = scmp.le.s32.totalorder 1, %s15
      %p181 = scmp.lt.s32.totalorder %s15, 3
      %p182 = pnand %p180, %p181
      %p183 = pneg %p182
      // Predicated region
      $region9: #{tpu_custom_call.1} parent=5 // pred_check
        _
      $region10: #{tpu_custom_call.1} parent=5 // pred_check_branch
        %185 = sbr.rel (%p182) target = $region12
      $region11: #{tpu_custom_call.1} parent=5 // pred_region
        %s186 = ssub.s32 %s15, 1
        // Predicated region
        $region13: #{tpu_custom_call.1} parent=11 // pred_check
          %p187 = pneg %p62
        $region14: #{tpu_custom_call.1} parent=11 // pred_check_branch
          %189 = sbr.rel (%p187) target = $region16
        $region15: #{tpu_custom_call.1} parent=11 // pred_region
          _
        $region16: #{tpu_custom_call.1} parent=11 // pred_fallthru
          _
        // Predicated region
        $region17: #{tpu_custom_call.1} parent=11 // pred_check
          %p190 = pneg %p83
        $region18: #{tpu_custom_call.1} parent=11 // pred_check_branch
          %192 = sbr.rel (%p190) target = $region20
        $region19: #{tpu_custom_call.1} parent=11 // pred_region
          _
        $region20: #{tpu_custom_call.1} parent=11 // pred_fallthru
          _
        // Predicated region
        $region21: #{tpu_custom_call.1} parent=11 // pred_check
          %p193 = pneg %p104
        $region22: #{tpu_custom_call.1} parent=11 // pred_check_branch
          %195 = sbr.rel (%p193) target = $region24
        $region23: #{tpu_custom_call.1} parent=11 // pred_region
          _
        $region24: #{tpu_custom_call.1} parent=11 // pred_fallthru
          _
        // Predicated region
        $region25: #{tpu_custom_call.1} parent=11 // pred_check
          %p196 = pneg %p125
        $region26: #{tpu_custom_call.1} parent=11 // pred_check_branch
          %198 = sbr.rel (%p196) target = $region28
        $region27: #{tpu_custom_call.1} parent=11 // pred_region
          _
        $region28: #{tpu_custom_call.1} parent=11 // pred_fallthru
          _
        // Predicated region
        $region29: #{tpu_custom_call.1} parent=11 // pred_check
          %p199 = pneg %p146
        $region30: #{tpu_custom_call.1} parent=11 // pred_check_branch
          %201 = sbr.rel (%p199) target = $region32
        $region31: #{tpu_custom_call.1} parent=11 // pred_region
          _
        $region32: #{tpu_custom_call.1} parent=11 // pred_fallthru
          _
      $region12: #{tpu_custom_call.1} parent=5 // pred_fallthru
        _
      %p202 = scmp.lt.s32.totalorder %s15, 2
      // Predicated region
      $region33: #{tpu_custom_call.1} parent=5 // pred_check
        %p203 = pneg %p202
      $region34: #{tpu_custom_call.1} parent=5 // pred_check_branch
        %205 = sbr.rel (%p203) target = $region36
      $region35: #{tpu_custom_call.1} parent=5 // pred_region
        // Predicated region
        $region37: #{tpu_custom_call.1} parent=35 // pred_check
          %p206 = pneg %p35
        $region38: #{tpu_custom_call.1} parent=35 // pred_check_branch
          %208 = sbr.rel (%p206) target = $region40
        $region39: #{tpu_custom_call.1} parent=35 // pred_region
          %p209 = scmp.lt.s32.totalorder %s15, 1
          %s210 = scalar_select %p209, %s15, 1
          %s211 = smul.addr %s210, 4
          %s212 = smul.addr %s211, 8
          %s213 = scalar_lea.vmem %s0, %s212
        $region40: #{tpu_custom_call.1} parent=35 // pred_fallthru
          _
      $region36: #{tpu_custom_call.1} parent=5 // pred_fallthru
        _
      %p214 = scmp.le.s32.totalorder 1, %s15
      %p215 = scmp.lt.s32.totalorder %s15, 3
      %p216 = pnand %p214, %p215
      %p217 = pneg %p216
      // Predicated region
      $region41: #{tpu_custom_call.1} parent=5 // pred_check
        _
      $region42: #{tpu_custom_call.1} parent=5 // pred_check_branch
        %219 = sbr.rel (%p216) target = $region44
      $region43: #{tpu_custom_call.1} parent=5 // pred_region
        %s220 = ssub.s32 %s15, 1
        %p221 = scmp.lt.s32.totalorder %s20, 1
        %s222 = scalar_select %p221, %s20, 1
        %s223 = smul.addr %s222, 4
        %s224 = smul.addr %s223, 8
        %s225 = scalar_lea.vmem %s0, %s224
        %p226 = pneg %p41
        %p227 = pneg %p38
        %p228 = pneg %p62
        %p229 = pneg %p59
        %p230 = pneg %p83
        %p231 = pneg %p80
        %p232 = pneg %p104
        %p233 = pneg %p101
        %p234 = pneg %p125
        %p235 = pneg %p122
        %p236 = pneg %p146
        %p237 = pneg %p143
        %p238 = pneg %p172
        %p239 = pneg %p169
        %s240 = sand.u32 %s159, 1
        %s241 = scalar_lea.sflag [#allocation3], %s240
        %s242 = sand.u32 %s159, 1
        %s243 = smul.addr %s242, 32
        %s244 = scalar_lea.vmem [#allocation2], %s243
        %p245 = scmp.lt.s32.totalorder %s20, 1
        %s246 = scalar_select %p245, %s20, 1
        %s247 = smul.addr %s246, 4
        %s248 = smul.addr %s247, 8
        %s249 = scalar_lea.vmem %s0, %s248
        %v250 = vld [vmem:[%s249] sm:$0xff]
        %v251 = vld [vmem:[%s249 + $0x8] sm:$0xff]
        %v252 = vld [vmem:[%s249 + $0x10] sm:$0xff]
        %v253 = vld [vmem:[%s249 + $0x18] sm:$0xff]
        %v254 = vld [vmem:[%s1] sm:$0xff]
        %v255 = vld [vmem:[%s1 + $0x8] sm:$0xff]
        %v256 = vld [vmem:[%s1 + $0x10] sm:$0xff]
        %v257 = vld [vmem:[%s1 + $0x18] sm:$0xff]
        %v258 = vld [vmem:[%s2] sm:$0xff]
        %v259 = vld [vmem:[%s2 + $0x8] sm:$0xff]
        %v260 = vld [vmem:[%s2 + $0x10] sm:$0xff]
        %v261 = vld [vmem:[%s2 + $0x18] sm:$0xff]
        %v262 = vld [vmem:[%s5] sm:$0xff]
        %v263 = vld [vmem:[%s5 + $0x8] sm:$0xff]
        %v264 = vld [vmem:[%s5 + $0x10] sm:$0xff]
        %v265 = vld [vmem:[%s5 + $0x18] sm:$0xff]
        %v266 = vld [vmem:[%s3] sm:$0xff]
        %v267 = vld [vmem:[%s3 + $0x8] sm:$0xff]
        %v268 = vld [vmem:[%s3 + $0x10] sm:$0xff]
        %v269 = vld [vmem:[%s3 + $0x18] sm:$0xff]
        %v270 = vld [vmem:[%s3 + $0x20] sm:$0xff]
        %v271 = vld [vmem:[%s3 + $0x28] sm:$0xff]
        %v272 = vld [vmem:[%s3 + $0x30] sm:$0xff]
        %v273 = vld [vmem:[%s3 + $0x38] sm:$0xff]
        %v274 = vld [vmem:[%s3 + $0x40] sm:$0xff]
        %v275 = vld [vmem:[%s3 + $0x48] sm:$0xff]
        %v276 = vld [vmem:[%s3 + $0x50] sm:$0xff]
        %v277 = vld [vmem:[%s3 + $0x58] sm:$0xff]
        %v278 = vld [vmem:[%s4] sm:$0xff]
        %v279 = vld [vmem:[%s4 + $0x8] sm:$0xff]
        %v280 = vld [vmem:[%s4 + $0x10] sm:$0xff]
        %v281 = vld [vmem:[%s4 + $0x18] sm:$0xff]
        %vm282 = vcmask 523264
        %v283 = vsel %vm282, %v250, 0.0
        %v284 = vsel %vm282, %v251, 0.0
        %v285 = vadd.f32 %v283, %v284
        %v286 = vsel %vm282, %v252, 0.0
        %v287 = vadd.f32 %v285, %v286
        %v288 = vsel %vm282, %v253, 0.0
        %v289 = vadd.f32 %v287, %v288
        %v290 = vrot.slane %v289, 4
        %v291 = vadd.f32 %v289, %v290
        %v292 = vrot.slane %v291, 2
        %v293 = vadd.f32 %v291, %v292
        %v294 = vrot.slane %v293, 1
        %v295 = vadd.f32 %v293, %v294
        %v296 = vrcp.pop 32.0
        %v297 = vmul.f32 %v295, %v296
        %v298 = vsub.f32 %v250, %v297
        %v299 = vsub.f32 %v251, %v297
        %v300 = vsub.f32 %v252, %v297
        %v301 = vsub.f32 %v253, %v297
        %v302 = vmul.f32 %v298, %v298
        %v303 = vmul.f32 %v299, %v299
        %v304 = vmul.f32 %v300, %v300
        %v305 = vmul.f32 %v301, %v301
        %v306 = vsel %vm282, %v302, 0.0
        %v307 = vsel %vm282, %v303, 0.0
        %v308 = vadd.f32 %v306, %v307
        %v309 = vsel %vm282, %v304, 0.0
        %v310 = vadd.f32 %v308, %v309
        %v311 = vsel %vm282, %v305, 0.0
        %v312 = vadd.f32 %v310, %v311
        %v313 = vrot.slane %v312, 4
        %v314 = vadd.f32 %v312, %v313
        %v315 = vrot.slane %v314, 2
        %v316 = vadd.f32 %v314, %v315
        %v317 = vrot.slane %v316, 1
        %v318 = vadd.f32 %v316, %v317
        %v319 = vmul.f32 %v318, %v296
        %v320 = vadd.f32 %v319, 1e-05
        %v321 = vrsqrt.pop %v320
        %v322 = vmul.f32 %v298, %v321
        %v323 = vmul.f32 %v299, %v321
        %v324 = vmul.f32 %v300, %v321
        %v325 = vmul.f32 %v301, %v321
        %327 = vset.pattern.permute.xlu0 0
        %328 = vperm.xlu0 %327, %v254
        %v329 = vpop.permute.xlu0 %328
        %332 = vset.pattern.permute.xlu0 0
        %333 = vperm.xlu0 %332, %v255
        %v334 = vpop.permute.xlu0 %333
        %337 = vset.pattern.permute.xlu0 0
        %338 = vperm.xlu0 %337, %v256
        %v339 = vpop.permute.xlu0 %338
        %342 = vset.pattern.permute.xlu0 0
        %343 = vperm.xlu0 %342, %v257
        %v344 = vpop.permute.xlu0 %343
        %v346 = vmul.f32 %v322, %v329
        %v347 = vmul.f32 %v323, %v334
        %v348 = vmul.f32 %v324, %v339
        %v349 = vmul.f32 %v325, %v344
        %351 = vset.pattern.permute.xlu0 0
        %352 = vperm.xlu0 %351, %v258
        %v353 = vpop.permute.xlu0 %352
        %356 = vset.pattern.permute.xlu0 0
        %357 = vperm.xlu0 %356, %v259
        %v358 = vpop.permute.xlu0 %357
        %361 = vset.pattern.permute.xlu0 0
        %362 = vperm.xlu0 %361, %v260
        %v363 = vpop.permute.xlu0 %362
        %366 = vset.pattern.permute.xlu0 0
        %367 = vperm.xlu0 %366, %v261
        %v368 = vpop.permute.xlu0 %367
        %v370 = vadd.f32 %v346, %v353
        %v371 = vadd.f32 %v347, %v358
        %v372 = vadd.f32 %v348, %v363
        %v373 = vadd.f32 %v349, %v368
        %vm374 = vcmask 261120
        %v376 = vsel %vm374, %v266, 0
        %v379 = vsel %vm374, %v267, 0
        %v382 = vsel %vm374, %v268, 0
        %v385 = vsel %vm374, %v269, 0
        %v388 = vsel %vm374, %v270, 0
        %v391 = vsel %vm374, %v271, 0
        %v394 = vsel %vm374, %v272, 0
        %v397 = vsel %vm374, %v273, 0
        %v400 = vsel %vm374, %v274, 0
        %v403 = vsel %vm374, %v275, 0
        %v406 = vsel %vm374, %v276, 0
        %v409 = vsel %vm374, %v277, 0
        %411 = vmatprep.subr.mxu0 0.0
        %412 = vmatpush1.msra.mxu0 0.0
        %413 = vmatprep.subr.mxu0 0.0
        %414 = vmatpush1.msra.mxu0 0.0
        %415 = vmatprep.subr.mxu0 0.0
        %416 = vmatpush1.msra.mxu0 0.0
        %417 = vmatprep.subr.mxu0 0.0
        %418 = vmatpush1.msra.mxu0 0.0
        %419 = vmatprep.subr.mxu0 0.0
        %420 = vmatpush1.msra.mxu0 0.0
        %421 = vmatprep.subr.mxu0 0.0
        %422 = vmatpush1.msra.mxu0 0.0
        %423 = vmatprep.subr.mxu0 0.0
        %424 = vmatpush1.msra.mxu0 0.0
        %425 = vmatprep.subr.mxu0 0.0
        %426 = vmatpush1.msra.mxu0 0.0
        %427 = vmatprep.subr.mxu0 0.0
        %428 = vmatpush1.msra.mxu0 0.0
        %429 = vmatprep.subr.mxu0 0.0
        %430 = vmatpush1.msra.mxu0 0.0
        %431 = vmatprep.subr.mxu0 0.0
        %432 = vmatpush1.msra.mxu0 0.0
        %433 = vmatprep.subr.mxu0 0.0
        %434 = vmatpush1.msra.mxu0 0.0
        %435 = vmatprep.subr.mxu0 0.0
        %436 = vmatpush1.msra.mxu0 %v373
        %437 = vmatprep.subr.mxu0 0.0
        %438 = vmatpush1.msra.mxu0 %v372
        %439 = vmatprep.subr.mxu0 0.0
        %440 = vmatpush1.msra.mxu0 %v371
        %441 = vmatprep.subr.mxu0 0.0
        %442 = vmatpush1.msra.mxu0 %v370
        %443 = vmatprep.subr.mxu0 0.0
        %444 = vmatpush2.msra.mxu0 0.0
        %445 = vmatprep.subr.mxu0 0.0
        %446 = vmatpush2.msra.mxu0 0.0
        %447 = vmatprep.subr.mxu0 0.0
        %448 = vmatpush2.msra.mxu0 0.0
        %449 = vmatprep.subr.mxu0 0.0
        %450 = vmatpush2.msra.mxu0 0.0
        %451 = vmatprep.subr.mxu0 0.0
        %452 = vmatpush2.msra.mxu0 0.0
        %453 = vmatprep.subr.mxu0 0.0
        %454 = vmatpush2.msra.mxu0 0.0
        %455 = vmatprep.subr.mxu0 0.0
        %456 = vmatpush2.msra.mxu0 0.0
        %457 = vmatprep.subr.mxu0 0.0
        %458 = vmatpush2.msra.mxu0 0.0
        %459 = vmatprep.subr.mxu0 0.0
        %460 = vmatpush2.msra.mxu0 0.0
        %461 = vmatprep.subr.mxu0 0.0
        %462 = vmatpush2.msra.mxu0 0.0
        %463 = vmatprep.subr.mxu0 0.0
        %464 = vmatpush2.msra.mxu0 0.0
        %465 = vmatprep.subr.mxu0 0.0
        %466 = vmatpush2.msra.mxu0 0.0
        %467 = vmatprep.subr.mxu0 0.0
        %468 = vmatpush2.msra.mxu0 0.0
        %469 = vmatprep.subr.mxu0 0.0
        %470 = vmatpush2.msra.mxu0 0.0
        %471 = vmatprep.subr.mxu0 0.0
        %472 = vmatpush2.msra.mxu0 0.0
        %473 = vmatprep.subr.mxu0 0.0
        %474 = vmatpush2.msra.mxu0 0.0
        %475 = vmatprep.mubr.f32.mxu0 0.0
        %476 = vmatmul.mubr.f32.gmra.mxu0 %v376
        %v477 = vpop.f32.mrf.mxu0
        %v478 = vadd.f32 0.0, %v477
        %v479 = vpop.f32.mrf.mxu0
        %480 = vmatprep.mubr.f32.mxu0 0.0
        %481 = vmatmul.mubr.f32.gmra.mxu0 %v379
        %v482 = vpop.f32.mrf.mxu0
        %v483 = vadd.f32 0.0, %v482
        %v484 = vpop.f32.mrf.mxu0
        %485 = vmatprep.mubr.f32.mxu0 0.0
        %486 = vmatmul.mubr.f32.gmra.mxu0 %v382
        %v487 = vpop.f32.mrf.mxu0
        %v488 = vadd.f32 0.0, %v487
        %v489 = vpop.f32.mrf.mxu0
        %490 = vmatprep.mubr.f32.mxu0 0.0
        %491 = vmatmul.mubr.f32.gmra.mxu0 %v385
        %v492 = vpop.f32.mrf.mxu0
        %v493 = vadd.f32 0.0, %v492
        %v494 = vpop.f32.mrf.mxu0
        %495 = vmatprep.mubr.f32.mxu0 0.0
        %496 = vmatmul.mubr.f32.gmra.mxu0 %v388
        %v497 = vpop.f32.mrf.mxu0
        %v498 = vadd.f32 0.0, %v497
        %v499 = vpop.f32.mrf.mxu0
        %500 = vmatprep.mubr.f32.mxu0 0.0
        %501 = vmatmul.mubr.f32.gmra.mxu0 %v391
        %v502 = vpop.f32.mrf.mxu0
        %v503 = vadd.f32 0.0, %v502
        %v504 = vpop.f32.mrf.mxu0
        %505 = vmatprep.mubr.f32.mxu0 0.0
        %506 = vmatmul.mubr.f32.gmra.mxu0 %v394
        %v507 = vpop.f32.mrf.mxu0
        %v508 = vadd.f32 0.0, %v507
        %v509 = vpop.f32.mrf.mxu0
        %510 = vmatprep.mubr.f32.mxu0 0.0
        %511 = vmatmul.mubr.f32.gmra.mxu0 %v397
        %v512 = vpop.f32.mrf.mxu0
        %v513 = vadd.f32 0.0, %v512
        %v514 = vpop.f32.mrf.mxu0
        %515 = vmatprep.mubr.f32.mxu0 0.0
        %516 = vmatmul.mubr.f32.gmra.mxu0 %v400
        %v517 = vpop.f32.mrf.mxu0
        %v518 = vadd.f32 0.0, %v517
        %v519 = vpop.f32.mrf.mxu0
        %520 = vmatprep.mubr.f32.mxu0 0.0
        %521 = vmatmul.mubr.f32.gmra.mxu0 %v403
        %v522 = vpop.f32.mrf.mxu0
        %v523 = vadd.f32 0.0, %v522
        %v524 = vpop.f32.mrf.mxu0
        %525 = vmatprep.mubr.f32.mxu0 0.0
        %526 = vmatmul.mubr.f32.gmra.mxu0 %v406
        %v527 = vpop.f32.mrf.mxu0
        %v528 = vadd.f32 0.0, %v527
        %v529 = vpop.f32.mrf.mxu0
        %530 = vmatprep.mubr.f32.mxu0 0.0
        %531 = vmatmul.mubr.f32.gmra.mxu0 %v409
        %v532 = vpop.f32.mrf.mxu0
        %v533 = vadd.f32 0.0, %v532
        %v534 = vpop.f32.mrf.mxu0
        %535 = vdwg.mxu0
        %536 = vxpose.xlu0.b32.start [1/16] %v478, 128
        %537 = vxpose.xlu0.b32.cont [2/16] 0.0, 128
        %538 = vxpose.xlu0.b32.cont [3/16] 0.0, 128
        %539 = vxpose.xlu0.b32.cont [4/16] 0.0, 128
        %540 = vxpose.xlu0.b32.cont [5/16] 0.0, 128
        %541 = vxpose.xlu0.b32.cont [6/16] 0.0, 128
        %542 = vxpose.xlu0.b32.cont [7/16] 0.0, 128
        %543 = vxpose.xlu0.b32.cont [8/16] 0.0, 128
        %544 = vxpose.xlu0.b32.cont [9/16] 0.0, 128
        %545 = vxpose.xlu0.b32.cont [10/16] 0.0, 128
        %546 = vxpose.xlu0.b32.cont [11/16] 0.0, 128
        %547 = vxpose.xlu0.b32.cont [12/16] 0.0, 128
        %548 = vxpose.xlu0.b32.cont [13/16] 0.0, 128
        %549 = vxpose.xlu0.b32.cont [14/16] 0.0, 128
        %550 = vxpose.xlu0.b32.cont [15/16] 0.0, 128
        %551 = vxpose.xlu0.b32.end [16/16] 0.0, 128
        %v552 = vpop.trf.xlu0
        %v553 = vpop.trf.xlu0
        %v554 = vpop.trf.xlu0
        %v555 = vpop.trf.xlu0
        %v556 = vpop.trf.xlu0
        %v557 = vpop.trf.xlu0
        %v558 = vpop.trf.xlu0
        %v559 = vpop.trf.xlu0
        %v560 = vpop.trf.xlu0
        %v561 = vpop.trf.xlu0
        %v562 = vpop.trf.xlu0
        %v563 = vpop.trf.xlu0
        %v564 = vpop.trf.xlu0
        %v565 = vpop.trf.xlu0
        %v566 = vpop.trf.xlu0
        %v567 = vpop.trf.xlu0
        %vm568 = vcmask 64512
        %v570 = vsel %vm568, %v552, 0
        %v573 = vsel %vm568, %v553, 0
        %v576 = vsel %vm568, %v554, 0
        %v579 = vsel %vm568, %v555, 0
        %v582 = vsel %vm568, %v556, 0
        %v585 = vsel %vm568, %v557, 0
        %v588 = vsel %vm568, %v558, 0
        %v591 = vsel %vm568, %v559, 0
        %593 = vmatprep.subr.mxu0 0.0
        %594 = vmatpush1.msra.mxu0 0.0
        %595 = vmatprep.subr.mxu0 0.0
        %596 = vmatpush1.msra.mxu0 0.0
        %597 = vmatprep.subr.mxu0 0.0
        %598 = vmatpush1.msra.mxu0 0.0
        %599 = vmatprep.subr.mxu0 0.0
        %600 = vmatpush1.msra.mxu0 0.0
        %601 = vmatprep.subr.mxu0 0.0
        %602 = vmatpush1.msra.mxu0 0.0
        %603 = vmatprep.subr.mxu0 0.0
        %604 = vmatpush1.msra.mxu0 0.0
        %605 = vmatprep.subr.mxu0 0.0
        %606 = vmatpush1.msra.mxu0 0.0
        %607 = vmatprep.subr.mxu0 0.0
        %608 = vmatpush1.msra.mxu0 0.0
        %609 = vmatprep.subr.mxu0 0.0
        %610 = vmatpush1.msra.mxu0 0.0
        %611 = vmatprep.subr.mxu0 0.0
        %612 = vmatpush1.msra.mxu0 0.0
        %613 = vmatprep.subr.mxu0 0.0
        %614 = vmatpush1.msra.mxu0 0.0
        %615 = vmatprep.subr.mxu0 0.0
        %616 = vmatpush1.msra.mxu0 0.0
        %617 = vmatprep.subr.mxu0 0.0
        %618 = vmatpush1.msra.mxu0 0.0
        %619 = vmatprep.subr.mxu0 0.0
        %620 = vmatpush1.msra.mxu0 0.0
        %621 = vmatprep.subr.mxu0 0.0
        %622 = vmatpush1.msra.mxu0 0.0
        %623 = vmatprep.subr.mxu0 0.0
        %624 = vmatpush1.msra.mxu0 %v498
        %625 = vmatprep.subr.mxu0 0.0
        %626 = vmatpush2.msra.mxu0 0.0
        %627 = vmatprep.subr.mxu0 0.0
        %628 = vmatpush2.msra.mxu0 0.0
        %629 = vmatprep.subr.mxu0 0.0
        %630 = vmatpush2.msra.mxu0 0.0
        %631 = vmatprep.subr.mxu0 0.0
        %632 = vmatpush2.msra.mxu0 0.0
        %633 = vmatprep.subr.mxu0 0.0
        %634 = vmatpush2.msra.mxu0 0.0
        %635 = vmatprep.subr.mxu0 0.0
        %636 = vmatpush2.msra.mxu0 0.0
        %637 = vmatprep.subr.mxu0 0.0
        %638 = vmatpush2.msra.mxu0 0.0
        %639 = vmatprep.subr.mxu0 0.0
        %640 = vmatpush2.msra.mxu0 0.0
        %641 = vmatprep.subr.mxu0 0.0
        %642 = vmatpush2.msra.mxu0 0.0
        %643 = vmatprep.subr.mxu0 0.0
        %644 = vmatpush2.msra.mxu0 0.0
        %645 = vmatprep.subr.mxu0 0.0
        %646 = vmatpush2.msra.mxu0 0.0
        %647 = vmatprep.subr.mxu0 0.0
        %648 = vmatpush2.msra.mxu0 0.0
        %649 = vmatprep.subr.mxu0 0.0
        %650 = vmatpush2.msra.mxu0 0.0
        %651 = vmatprep.subr.mxu0 0.0
        %652 = vmatpush2.msra.mxu0 0.0
        %653 = vmatprep.subr.mxu0 0.0
        %654 = vmatpush2.msra.mxu0 0.0
        %655 = vmatprep.subr.mxu0 0.0
        %656 = vmatpush2.msra.mxu0 0.0
        %657 = vmatprep.mubr.f32.mxu0 0.0
        %658 = vmatmul.mubr.f32.gmra.mxu0 %v570
        %v659 = vpop.f32.mrf.mxu0
        %v660 = vadd.f32 0.0, %v659
        %v661 = vpop.f32.mrf.mxu0
        %662 = vmatprep.mubr.f32.mxu0 0.0
        %663 = vmatmul.mubr.f32.gmra.mxu0 %v573
        %v664 = vpop.f32.mrf.mxu0
        %v665 = vadd.f32 0.0, %v664
        %v666 = vpop.f32.mrf.mxu0
        %667 = vmatprep.mubr.f32.mxu0 0.0
        %668 = vmatmul.mubr.f32.gmra.mxu0 %v576
        %v669 = vpop.f32.mrf.mxu0
        %v670 = vadd.f32 0.0, %v669
        %v671 = vpop.f32.mrf.mxu0
        %672 = vmatprep.mubr.f32.mxu0 0.0
        %673 = vmatmul.mubr.f32.gmra.mxu0 %v579
        %v674 = vpop.f32.mrf.mxu0
        %v675 = vadd.f32 0.0, %v674
        %v676 = vpop.f32.mrf.mxu0
        %677 = vmatprep.mubr.f32.mxu0 0.0
        %678 = vmatmul.mubr.f32.gmra.mxu0 %v582
        %v679 = vpop.f32.mrf.mxu0
        %v680 = vadd.f32 0.0, %v679
        %v681 = vpop.f32.mrf.mxu0
        %682 = vmatprep.mubr.f32.mxu0 0.0
        %683 = vmatmul.mubr.f32.gmra.mxu0 %v585
        %v684 = vpop.f32.mrf.mxu0
        %v685 = vadd.f32 0.0, %v684
        %v686 = vpop.f32.mrf.mxu0
        %687 = vmatprep.mubr.f32.mxu0 0.0
        %688 = vmatmul.mubr.f32.gmra.mxu0 %v588
        %v689 = vpop.f32.mrf.mxu0
        %v690 = vadd.f32 0.0, %v689
        %v691 = vpop.f32.mrf.mxu0
        %692 = vmatprep.mubr.f32.mxu0 0.0
        %693 = vmatmul.mubr.f32.gmra.mxu0 %v591
        %v694 = vpop.f32.mrf.mxu0
        %v695 = vadd.f32 0.0, %v694
        %v696 = vpop.f32.mrf.mxu0
        %697 = vdwg.mxu0
        %v698 = vsel %vm282, %v660, -inf
        %699 = vmax.xlane.f32.xlu0 %v698
        %v700 = vpop.xlane.xlu0 %699
        %v701 = vsel %vm282, %v665, -inf
        %702 = vmax.xlane.f32.xlu0 %v701
        %v703 = vpop.xlane.xlu0 %702
        %v704 = vsel %vm282, %v670, -inf
        %705 = vmax.xlane.f32.xlu0 %v704
        %v706 = vpop.xlane.xlu0 %705
        %v707 = vsel %vm282, %v675, -inf
        %708 = vmax.xlane.f32.xlu0 %v707
        %v709 = vpop.xlane.xlu0 %708
        %v710 = vsel %vm282, %v680, -inf
        %711 = vmax.xlane.f32.xlu0 %v710
        %v712 = vpop.xlane.xlu0 %711
        %v713 = vsel %vm282, %v685, -inf
        %714 = vmax.xlane.f32.xlu0 %v713
        %v715 = vpop.xlane.xlu0 %714
        %v716 = vsel %vm282, %v690, -inf
        %717 = vmax.xlane.f32.xlu0 %v716
        %v718 = vpop.xlane.xlu0 %717
        %v719 = vsel %vm282, %v695, -inf
        %720 = vmax.xlane.f32.xlu0 %v719
        %v721 = vpop.xlane.xlu0 %720
        %v722 = vsub.f32 %v660, %v700
        %v723 = vsub.f32 %v665, %v703
        %v724 = vsub.f32 %v670, %v706
        %v725 = vsub.f32 %v675, %v709
        %v726 = vsub.f32 %v680, %v712
        %v727 = vsub.f32 %v685, %v715
        %v728 = vsub.f32 %v690, %v718
        %v729 = vsub.f32 %v695, %v721
        %v730 = vmul.f32 %v722, 1.442695
        %v731 = vpow.pop %v730
        %v732 = vmul.f32 %v723, 1.442695
        %v733 = vpow.pop %v732
        %v734 = vmul.f32 %v724, 1.442695
        %v735 = vpow.pop %v734
        %v736 = vmul.f32 %v725, 1.442695
        %v737 = vpow.pop %v736
        %v738 = vmul.f32 %v726, 1.442695
        %v739 = vpow.pop %v738
        %v740 = vmul.f32 %v727, 1.442695
        %v741 = vpow.pop %v740
        %v742 = vmul.f32 %v728, 1.442695
        %v743 = vpow.pop %v742
        %v744 = vmul.f32 %v729, 1.442695
        %v745 = vpow.pop %v744
        %v746 = vsel %vm282, %v731, 0.0
        %747 = vadd.xlane.f32.xlu0 %v746
        %v748 = vpop.xlane.xlu0 %747
        %v749 = vsel %vm282, %v733, 0.0
        %750 = vadd.xlane.f32.xlu0 %v749
        %v751 = vpop.xlane.xlu0 %750
        %v752 = vsel %vm282, %v735, 0.0
        %753 = vadd.xlane.f32.xlu0 %v752
        %v754 = vpop.xlane.xlu0 %753
        %v755 = vsel %vm282, %v737, 0.0
        %756 = vadd.xlane.f32.xlu0 %v755
        %v757 = vpop.xlane.xlu0 %756
        %v758 = vsel %vm282, %v739, 0.0
        %759 = vadd.xlane.f32.xlu0 %v758
        %v760 = vpop.xlane.xlu0 %759
        %v761 = vsel %vm282, %v741, 0.0
        %762 = vadd.xlane.f32.xlu0 %v761
        %v763 = vpop.xlane.xlu0 %762
        %v764 = vsel %vm282, %v743, 0.0
        %765 = vadd.xlane.f32.xlu0 %v764
        %v766 = vpop.xlane.xlu0 %765
        %v767 = vsel %vm282, %v745, 0.0
        %768 = vadd.xlane.f32.xlu0 %v767
        %v769 = vpop.xlane.xlu0 %768
        %v770 = vrcp.pop %v748
        %v771 = vrcp.pop %v751
        %v772 = vrcp.pop %v754
        %v773 = vrcp.pop %v757
        %v774 = vrcp.pop %v760
        %v775 = vrcp.pop %v763
        %v776 = vrcp.pop %v766
        %v777 = vrcp.pop %v769
        %v778 = vmul.f32 %v731, %v770
        %v779 = vmul.f32 %v733, %v771
        %v780 = vmul.f32 %v735, %v772
        %v781 = vmul.f32 %v737, %v773
        %v782 = vmul.f32 %v739, %v774
        %v783 = vmul.f32 %v741, %v775
        %v784 = vmul.f32 %v743, %v776
        %v785 = vmul.f32 %v745, %v777
        %v787 = vsel %vm282, %v518, 0
        %v790 = vsel %vm282, %v778, 0
        %v793 = vsel %vm282, %v779, 0
        %v796 = vsel %vm282, %v780, 0
        %v799 = vsel %vm282, %v781, 0
        %v802 = vsel %vm282, %v782, 0
        %v805 = vsel %vm282, %v783, 0
        %v808 = vsel %vm282, %v784, 0
        %v811 = vsel %vm282, %v785, 0
        %813 = vmatprep.subr.mxu0 0.0
        %814 = vmatpush1.xpose.msra.mxu0 0.0
        %815 = vmatprep.subr.mxu0 0.0
        %816 = vmatpush1.xpose.msra.mxu0 0.0
        %817 = vmatprep.subr.mxu0 0.0
        %818 = vmatpush1.xpose.msra.mxu0 0.0
        %819 = vmatprep.subr.mxu0 0.0
        %820 = vmatpush1.xpose.msra.mxu0 0.0
        %821 = vmatprep.subr.mxu0 0.0
        %822 = vmatpush1.xpose.msra.mxu0 0.0
        %823 = vmatprep.subr.mxu0 0.0
        %824 = vmatpush1.xpose.msra.mxu0 0.0
        %825 = vmatprep.subr.mxu0 0.0
        %826 = vmatpush1.xpose.msra.mxu0 0.0
        %827 = vmatprep.subr.mxu0 0.0
        %828 = vmatpush1.xpose.msra.mxu0 0.0
        %829 = vmatprep.subr.mxu0 0.0
        %830 = vmatpush1.xpose.msra.mxu0 %v811
        %831 = vmatprep.subr.mxu0 0.0
        %832 = vmatpush1.xpose.msra.mxu0 %v808
        %833 = vmatprep.subr.mxu0 0.0
        %834 = vmatpush1.xpose.msra.mxu0 %v805
        %835 = vmatprep.subr.mxu0 0.0
        %836 = vmatpush1.xpose.msra.mxu0 %v802
        %837 = vmatprep.subr.mxu0 0.0
        %838 = vmatpush1.xpose.msra.mxu0 %v799
        %839 = vmatprep.subr.mxu0 0.0
        %840 = vmatpush1.xpose.msra.mxu0 %v796
        %841 = vmatprep.subr.mxu0 0.0
        %842 = vmatpush1.xpose.msra.mxu0 %v793
        %843 = vmatprep.subr.mxu0 0.0
        %844 = vmatpush1.xpose.msra.mxu0 %v790
        %845 = vmatprep.subr.mxu0 0.0
        %846 = vmatpush2.xpose.msra.mxu0 0.0
        %847 = vmatprep.subr.mxu0 0.0
        %848 = vmatpush2.xpose.msra.mxu0 0.0
        %849 = vmatprep.subr.mxu0 0.0
        %850 = vmatpush2.xpose.msra.mxu0 0.0
        %851 = vmatprep.subr.mxu0 0.0
        %852 = vmatpush2.xpose.msra.mxu0 0.0
        %853 = vmatprep.subr.mxu0 0.0
        %854 = vmatpush2.xpose.msra.mxu0 0.0
        %855 = vmatprep.subr.mxu0 0.0
        %856 = vmatpush2.xpose.msra.mxu0 0.0
        %857 = vmatprep.subr.mxu0 0.0
        %858 = vmatpush2.xpose.msra.mxu0 0.0
        %859 = vmatprep.subr.mxu0 0.0
        %860 = vmatpush2.xpose.msra.mxu0 0.0
        %861 = vmatprep.subr.mxu0 0.0
        %862 = vmatpush2.xpose.msra.mxu0 0.0
        %863 = vmatprep.subr.mxu0 0.0
        %864 = vmatpush2.xpose.msra.mxu0 0.0
        %865 = vmatprep.subr.mxu0 0.0
        %866 = vmatpush2.xpose.msra.mxu0 0.0
        %867 = vmatprep.subr.mxu0 0.0
        %868 = vmatpush2.xpose.msra.mxu0 0.0
        %869 = vmatprep.subr.mxu0 0.0
        %870 = vmatpush2.xpose.msra.mxu0 0.0
        %871 = vmatprep.subr.mxu0 0.0
        %872 = vmatpush2.xpose.msra.mxu0 0.0
        %873 = vmatprep.subr.mxu0 0.0
        %874 = vmatpush2.xpose.msra.mxu0 0.0
        %875 = vmatprep.subr.mxu0 0.0
        %876 = vmatpush2.xpose.msra.mxu0 0.0
        %877 = vmatprep.mubr.f32.mxu0 0.0
        %878 = vmatmul.mubr.f32.gmra.mxu0 %v787
        %v879 = vpop.f32.mrf.mxu0
        %v880 = vadd.f32 0.0, %v879
        %v881 = vpop.f32.mrf.mxu0
        %882 = vdwg.mxu0
        %883 = vxpose.xlu0.b32.start [1/16] %v483, 128
        %884 = vxpose.xlu0.b32.cont [2/16] 0.0, 128
        %885 = vxpose.xlu0.b32.cont [3/16] 0.0, 128
        %886 = vxpose.xlu0.b32.cont [4/16] 0.0, 128
        %887 = vxpose.xlu0.b32.cont [5/16] 0.0, 128
        %888 = vxpose.xlu0.b32.cont [6/16] 0.0, 128
        %889 = vxpose.xlu0.b32.cont [7/16] 0.0, 128
        %890 = vxpose.xlu0.b32.cont [8/16] 0.0, 128
        %891 = vxpose.xlu0.b32.cont [9/16] 0.0, 128
        %892 = vxpose.xlu0.b32.cont [10/16] 0.0, 128
        %893 = vxpose.xlu0.b32.cont [11/16] 0.0, 128
        %894 = vxpose.xlu0.b32.cont [12/16] 0.0, 128
        %895 = vxpose.xlu0.b32.cont [13/16] 0.0, 128
        %896 = vxpose.xlu0.b32.cont [14/16] 0.0, 128
        %897 = vxpose.xlu0.b32.cont [15/16] 0.0, 128
        %898 = vxpose.xlu0.b32.end [16/16] 0.0, 128
        %v899 = vpop.trf.xlu0
        %v900 = vpop.trf.xlu0
        %v901 = vpop.trf.xlu0
        %v902 = vpop.trf.xlu0
        %v903 = vpop.trf.xlu0
        %v904 = vpop.trf.xlu0
        %v905 = vpop.trf.xlu0
        %v906 = vpop.trf.xlu0
        %v907 = vpop.trf.xlu0
        %v908 = vpop.trf.xlu0
        %v909 = vpop.trf.xlu0
        %v910 = vpop.trf.xlu0
        %v911 = vpop.trf.xlu0
        %v912 = vpop.trf.xlu0
        %v913 = vpop.trf.xlu0
        %v914 = vpop.trf.xlu0
        %v916 = vsel %vm568, %v899, 0
        %v919 = vsel %vm568, %v900, 0
        %v922 = vsel %vm568, %v901, 0
        %v925 = vsel %vm568, %v902, 0
        %v928 = vsel %vm568, %v903, 0
        %v931 = vsel %vm568, %v904, 0
        %v934 = vsel %vm568, %v905, 0
        %v937 = vsel %vm568, %v906, 0
        %939 = vmatprep.subr.mxu0 0.0
        %940 = vmatpush1.msra.mxu0 0.0
        %941 = vmatprep.subr.mxu0 0.0
        %942 = vmatpush1.msra.mxu0 0.0
        %943 = vmatprep.subr.mxu0 0.0
        %944 = vmatpush1.msra.mxu0 0.0
        %945 = vmatprep.subr.mxu0 0.0
        %946 = vmatpush1.msra.mxu0 0.0
        %947 = vmatprep.subr.mxu0 0.0
        %948 = vmatpush1.msra.mxu0 0.0
        %949 = vmatprep.subr.mxu0 0.0
        %950 = vmatpush1.msra.mxu0 0.0
        %951 = vmatprep.subr.mxu0 0.0
        %952 = vmatpush1.msra.mxu0 0.0
        %953 = vmatprep.subr.mxu0 0.0
        %954 = vmatpush1.msra.mxu0 0.0
        %955 = vmatprep.subr.mxu0 0.0
        %956 = vmatpush1.msra.mxu0 0.0
        %957 = vmatprep.subr.mxu0 0.0
        %958 = vmatpush1.msra.mxu0 0.0
        %959 = vmatprep.subr.mxu0 0.0
        %960 = vmatpush1.msra.mxu0 0.0
        %961 = vmatprep.subr.mxu0 0.0
        %962 = vmatpush1.msra.mxu0 0.0
        %963 = vmatprep.subr.mxu0 0.0
        %964 = vmatpush1.msra.mxu0 0.0
        %965 = vmatprep.subr.mxu0 0.0
        %966 = vmatpush1.msra.mxu0 0.0
        %967 = vmatprep.subr.mxu0 0.0
        %968 = vmatpush1.msra.mxu0 0.0
        %969 = vmatprep.subr.mxu0 0.0
        %970 = vmatpush1.msra.mxu0 %v503
        %971 = vmatprep.subr.mxu0 0.0
        %972 = vmatpush2.msra.mxu0 0.0
        %973 = vmatprep.subr.mxu0 0.0
        %974 = vmatpush2.msra.mxu0 0.0
        %975 = vmatprep.subr.mxu0 0.0
        %976 = vmatpush2.msra.mxu0 0.0
        %977 = vmatprep.subr.mxu0 0.0
        %978 = vmatpush2.msra.mxu0 0.0
        %979 = vmatprep.subr.mxu0 0.0
        %980 = vmatpush2.msra.mxu0 0.0
        %981 = vmatprep.subr.mxu0 0.0
        %982 = vmatpush2.msra.mxu0 0.0
        %983 = vmatprep.subr.mxu0 0.0
        %984 = vmatpush2.msra.mxu0 0.0
        %985 = vmatprep.subr.mxu0 0.0
        %986 = vmatpush2.msra.mxu0 0.0
        %987 = vmatprep.subr.mxu0 0.0
        %988 = vmatpush2.msra.mxu0 0.0
        %989 = vmatprep.subr.mxu0 0.0
        %990 = vmatpush2.msra.mxu0 0.0
        %991 = vmatprep.subr.mxu0 0.0
        %992 = vmatpush2.msra.mxu0 0.0
        %993 = vmatprep.subr.mxu0 0.0
        %994 = vmatpush2.msra.mxu0 0.0
        %995 = vmatprep.subr.mxu0 0.0
        %996 = vmatpush2.msra.mxu0 0.0
        %997 = vmatprep.subr.mxu0 0.0
        %998 = vmatpush2.msra.mxu0 0.0
        %999 = vmatprep.subr.mxu0 0.0
        %1000 = vmatpush2.msra.mxu0 0.0
        %1001 = vmatprep.subr.mxu0 0.0
        %1002 = vmatpush2.msra.mxu0 0.0
        %1003 = vmatprep.mubr.f32.mxu0 0.0
        %1004 = vmatmul.mubr.f32.gmra.mxu0 %v916
        %v1005 = vpop.f32.mrf.mxu0
        %v1006 = vadd.f32 0.0, %v1005
        %v1007 = vpop.f32.mrf.mxu0
        %1008 = vmatprep.mubr.f32.mxu0 0.0
        %1009 = vmatmul.mubr.f32.gmra.mxu0 %v919
        %v1010 = vpop.f32.mrf.mxu0
        %v1011 = vadd.f32 0.0, %v1010
        %v1012 = vpop.f32.mrf.mxu0
        %1013 = vmatprep.mubr.f32.mxu0 0.0
        %1014 = vmatmul.mubr.f32.gmra.mxu0 %v922
        %v1015 = vpop.f32.mrf.mxu0
        %v1016 = vadd.f32 0.0, %v1015
        %v1017 = vpop.f32.mrf.mxu0
        %1018 = vmatprep.mubr.f32.mxu0 0.0
        %1019 = vmatmul.mubr.f32.gmra.mxu0 %v925
        %v1020 = vpop.f32.mrf.mxu0
        %v1021 = vadd.f32 0.0, %v1020
        %v1022 = vpop.f32.mrf.mxu0
        %1023 = vmatprep.mubr.f32.mxu0 0.0
        %1024 = vmatmul.mubr.f32.gmra.mxu0 %v928
        %v1025 = vpop.f32.mrf.mxu0
        %v1026 = vadd.f32 0.0, %v1025
        %v1027 = vpop.f32.mrf.mxu0
        %1028 = vmatprep.mubr.f32.mxu0 0.0
        %1029 = vmatmul.mubr.f32.gmra.mxu0 %v931
        %v1030 = vpop.f32.mrf.mxu0
        %v1031 = vadd.f32 0.0, %v1030
        %v1032 = vpop.f32.mrf.mxu0
        %1033 = vmatprep.mubr.f32.mxu0 0.0
        %1034 = vmatmul.mubr.f32.gmra.mxu0 %v934
        %v1035 = vpop.f32.mrf.mxu0
        %v1036 = vadd.f32 0.0, %v1035
        %v1037 = vpop.f32.mrf.mxu0
        %1038 = vmatprep.mubr.f32.mxu0 0.0
        %1039 = vmatmul.mubr.f32.gmra.mxu0 %v937
        %v1040 = vpop.f32.mrf.mxu0
        %v1041 = vadd.f32 0.0, %v1040
        %v1042 = vpop.f32.mrf.mxu0
        %1043 = vdwg.mxu0
        %v1044 = vsel %vm282, %v1006, -inf
        %1045 = vmax.xlane.f32.xlu0 %v1044
        %v1046 = vpop.xlane.xlu0 %1045
        %v1047 = vsel %vm282, %v1011, -inf
        %1048 = vmax.xlane.f32.xlu0 %v1047
        %v1049 = vpop.xlane.xlu0 %1048
        %v1050 = vsel %vm282, %v1016, -inf
        %1051 = vmax.xlane.f32.xlu0 %v1050
        %v1052 = vpop.xlane.xlu0 %1051
        %v1053 = vsel %vm282, %v1021, -inf
        %1054 = vmax.xlane.f32.xlu0 %v1053
        %v1055 = vpop.xlane.xlu0 %1054
        %v1056 = vsel %vm282, %v1026, -inf
        %1057 = vmax.xlane.f32.xlu0 %v1056
        %v1058 = vpop.xlane.xlu0 %1057
        %v1059 = vsel %vm282, %v1031, -inf
        %1060 = vmax.xlane.f32.xlu0 %v1059
        %v1061 = vpop.xlane.xlu0 %1060
        %v1062 = vsel %vm282, %v1036, -inf
        %1063 = vmax.xlane.f32.xlu0 %v1062
        %v1064 = vpop.xlane.xlu0 %1063
        %v1065 = vsel %vm282, %v1041, -inf
        %1066 = vmax.xlane.f32.xlu0 %v1065
        %v1067 = vpop.xlane.xlu0 %1066
        %v1068 = vsub.f32 %v1006, %v1046
        %v1069 = vsub.f32 %v1011, %v1049
        %v1070 = vsub.f32 %v1016, %v1052
        %v1071 = vsub.f32 %v1021, %v1055
        %v1072 = vsub.f32 %v1026, %v1058
        %v1073 = vsub.f32 %v1031, %v1061
        %v1074 = vsub.f32 %v1036, %v1064
        %v1075 = vsub.f32 %v1041, %v1067
        %v1076 = vmul.f32 %v1068, 1.442695
        %v1077 = vpow.pop %v1076
        %v1078 = vmul.f32 %v1069, 1.442695
        %v1079 = vpow.pop %v1078
        %v1080 = vmul.f32 %v1070, 1.442695
        %v1081 = vpow.pop %v1080
        %v1082 = vmul.f32 %v1071, 1.442695
        %v1083 = vpow.pop %v1082
        %v1084 = vmul.f32 %v1072, 1.442695
        %v1085 = vpow.pop %v1084
        %v1086 = vmul.f32 %v1073, 1.442695
        %v1087 = vpow.pop %v1086
        %v1088 = vmul.f32 %v1074, 1.442695
        %v1089 = vpow.pop %v1088
        %v1090 = vmul.f32 %v1075, 1.442695
        %v1091 = vpow.pop %v1090
        %v1092 = vsel %vm282, %v1077, 0.0
        %1093 = vadd.xlane.f32.xlu0 %v1092
        %v1094 = vpop.xlane.xlu0 %1093
        %v1095 = vsel %vm282, %v1079, 0.0
        %1096 = vadd.xlane.f32.xlu0 %v1095
        %v1097 = vpop.xlane.xlu0 %1096
        %v1098 = vsel %vm282, %v1081, 0.0
        %1099 = vadd.xlane.f32.xlu0 %v1098
        %v1100 = vpop.xlane.xlu0 %1099
        %v1101 = vsel %vm282, %v1083, 0.0
        %1102 = vadd.xlane.f32.xlu0 %v1101
        %v1103 = vpop.xlane.xlu0 %1102
        %v1104 = vsel %vm282, %v1085, 0.0
        %1105 = vadd.xlane.f32.xlu0 %v1104
        %v1106 = vpop.xlane.xlu0 %1105
        %v1107 = vsel %vm282, %v1087, 0.0
        %1108 = vadd.xlane.f32.xlu0 %v1107
        %v1109 = vpop.xlane.xlu0 %1108
        %v1110 = vsel %vm282, %v1089, 0.0
        %1111 = vadd.xlane.f32.xlu0 %v1110
        %v1112 = vpop.xlane.xlu0 %1111
        %v1113 = vsel %vm282, %v1091, 0.0
        %1114 = vadd.xlane.f32.xlu0 %v1113
        %v1115 = vpop.xlane.xlu0 %1114
        %v1116 = vrcp.pop %v1094
        %v1117 = vrcp.pop %v1097
        %v1118 = vrcp.pop %v1100
        %v1119 = vrcp.pop %v1103
        %v1120 = vrcp.pop %v1106
        %v1121 = vrcp.pop %v1109
        %v1122 = vrcp.pop %v1112
        %v1123 = vrcp.pop %v1115
        %v1124 = vmul.f32 %v1077, %v1116
        %v1125 = vmul.f32 %v1079, %v1117
        %v1126 = vmul.f32 %v1081, %v1118
        %v1127 = vmul.f32 %v1083, %v1119
        %v1128 = vmul.f32 %v1085, %v1120
        %v1129 = vmul.f32 %v1087, %v1121
        %v1130 = vmul.f32 %v1089, %v1122
        %v1131 = vmul.f32 %v1091, %v1123
        %v1133 = vsel %vm282, %v523, 0
        %v1136 = vsel %vm282, %v1124, 0
        %v1139 = vsel %vm282, %v1125, 0
        %v1142 = vsel %vm282, %v1126, 0
        %v1145 = vsel %vm282, %v1127, 0
        %v1148 = vsel %vm282, %v1128, 0
        %v1151 = vsel %vm282, %v1129, 0
        %v1154 = vsel %vm282, %v1130, 0
        %v1157 = vsel %vm282, %v1131, 0
        %1159 = vmatprep.subr.mxu0 0.0
        %1160 = vmatpush1.xpose.msra.mxu0 0.0
        %1161 = vmatprep.subr.mxu0 0.0
        %1162 = vmatpush1.xpose.msra.mxu0 0.0
        %1163 = vmatprep.subr.mxu0 0.0
        %1164 = vmatpush1.xpose.msra.mxu0 0.0
        %1165 = vmatprep.subr.mxu0 0.0
        %1166 = vmatpush1.xpose.msra.mxu0 0.0
        %1167 = vmatprep.subr.mxu0 0.0
        %1168 = vmatpush1.xpose.msra.mxu0 0.0
        %1169 = vmatprep.subr.mxu0 0.0
        %1170 = vmatpush1.xpose.msra.mxu0 0.0
        %1171 = vmatprep.subr.mxu0 0.0
        %1172 = vmatpush1.xpose.msra.mxu0 0.0
        %1173 = vmatprep.subr.mxu0 0.0
        %1174 = vmatpush1.xpose.msra.mxu0 0.0
        %1175 = vmatprep.subr.mxu0 0.0
        %1176 = vmatpush1.xpose.msra.mxu0 %v1157
        %1177 = vmatprep.subr.mxu0 0.0
        %1178 = vmatpush1.xpose.msra.mxu0 %v1154
        %1179 = vmatprep.subr.mxu0 0.0
        %1180 = vmatpush1.xpose.msra.mxu0 %v1151
        %1181 = vmatprep.subr.mxu0 0.0
        %1182 = vmatpush1.xpose.msra.mxu0 %v1148
        %1183 = vmatprep.subr.mxu0 0.0
        %1184 = vmatpush1.xpose.msra.mxu0 %v1145
        %1185 = vmatprep.subr.mxu0 0.0
        %1186 = vmatpush1.xpose.msra.mxu0 %v1142
        %1187 = vmatprep.subr.mxu0 0.0
        %1188 = vmatpush1.xpose.msra.mxu0 %v1139
        %1189 = vmatprep.subr.mxu0 0.0
        %1190 = vmatpush1.xpose.msra.mxu0 %v1136
        %1191 = vmatprep.subr.mxu0 0.0
        %1192 = vmatpush2.xpose.msra.mxu0 0.0
        %1193 = vmatprep.subr.mxu0 0.0
        %1194 = vmatpush2.xpose.msra.mxu0 0.0
        %1195 = vmatprep.subr.mxu0 0.0
        %1196 = vmatpush2.xpose.msra.mxu0 0.0
        %1197 = vmatprep.subr.mxu0 0.0
        %1198 = vmatpush2.xpose.msra.mxu0 0.0
        %1199 = vmatprep.subr.mxu0 0.0
        %1200 = vmatpush2.xpose.msra.mxu0 0.0
        %1201 = vmatprep.subr.mxu0 0.0
        %1202 = vmatpush2.xpose.msra.mxu0 0.0
        %1203 = vmatprep.subr.mxu0 0.0
        %1204 = vmatpush2.xpose.msra.mxu0 0.0
        %1205 = vmatprep.subr.mxu0 0.0
        %1206 = vmatpush2.xpose.msra.mxu0 0.0
        %1207 = vmatprep.subr.mxu0 0.0
        %1208 = vmatpush2.xpose.msra.mxu0 0.0
        %1209 = vmatprep.subr.mxu0 0.0
        %1210 = vmatpush2.xpose.msra.mxu0 0.0
        %1211 = vmatprep.subr.mxu0 0.0
        %1212 = vmatpush2.xpose.msra.mxu0 0.0
        %1213 = vmatprep.subr.mxu0 0.0
        %1214 = vmatpush2.xpose.msra.mxu0 0.0
        %1215 = vmatprep.subr.mxu0 0.0
        %1216 = vmatpush2.xpose.msra.mxu0 0.0
        %1217 = vmatprep.subr.mxu0 0.0
        %1218 = vmatpush2.xpose.msra.mxu0 0.0
        %1219 = vmatprep.subr.mxu0 0.0
        %1220 = vmatpush2.xpose.msra.mxu0 0.0
        %1221 = vmatprep.subr.mxu0 0.0
        %1222 = vmatpush2.xpose.msra.mxu0 0.0
        %1223 = vmatprep.mubr.f32.mxu0 0.0
        %1224 = vmatmul.mubr.f32.gmra.mxu0 %v1133
        %v1225 = vpop.f32.mrf.mxu0
        %v1226 = vadd.f32 0.0, %v1225
        %v1227 = vpop.f32.mrf.mxu0
        %1228 = vdwg.mxu0
        %1229 = vxpose.xlu0.b32.start [1/16] %v488, 128
        %1230 = vxpose.xlu0.b32.cont [2/16] 0.0, 128
        %1231 = vxpose.xlu0.b32.cont [3/16] 0.0, 128
        %1232 = vxpose.xlu0.b32.cont [4/16] 0.0, 128
        %1233 = vxpose.xlu0.b32.cont [5/16] 0.0, 128
        %1234 = vxpose.xlu0.b32.cont [6/16] 0.0, 128
        %1235 = vxpose.xlu0.b32.cont [7/16] 0.0, 128
        %1236 = vxpose.xlu0.b32.cont [8/16] 0.0, 128
        %1237 = vxpose.xlu0.b32.cont [9/16] 0.0, 128
        %1238 = vxpose.xlu0.b32.cont [10/16] 0.0, 128
        %1239 = vxpose.xlu0.b32.cont [11/16] 0.0, 128
        %1240 = vxpose.xlu0.b32.cont [12/16] 0.0, 128
        %1241 = vxpose.xlu0.b32.cont [13/16] 0.0, 128
        %1242 = vxpose.xlu0.b32.cont [14/16] 0.0, 128
        %1243 = vxpose.xlu0.b32.cont [15/16] 0.0, 128
        %1244 = vxpose.xlu0.b32.end [16/16] 0.0, 128
        %v1245 = vpop.trf.xlu0
        %v1246 = vpop.trf.xlu0
        %v1247 = vpop.trf.xlu0
        %v1248 = vpop.trf.xlu0
        %v1249 = vpop.trf.xlu0
        %v1250 = vpop.trf.xlu0
        %v1251 = vpop.trf.xlu0
        %v1252 = vpop.trf.xlu0
        %v1253 = vpop.trf.xlu0
        %v1254 = vpop.trf.xlu0
        %v1255 = vpop.trf.xlu0
        %v1256 = vpop.trf.xlu0
        %v1257 = vpop.trf.xlu0
        %v1258 = vpop.trf.xlu0
        %v1259 = vpop.trf.xlu0
        %v1260 = vpop.trf.xlu0
        %v1262 = vsel %vm568, %v1245, 0
        %v1265 = vsel %vm568, %v1246, 0
        %v1268 = vsel %vm568, %v1247, 0
        %v1271 = vsel %vm568, %v1248, 0
        %v1274 = vsel %vm568, %v1249, 0
        %v1277 = vsel %vm568, %v1250, 0
        %v1280 = vsel %vm568, %v1251, 0
        %v1283 = vsel %vm568, %v1252, 0
        %1285 = vmatprep.subr.mxu0 0.0
        %1286 = vmatpush1.msra.mxu0 0.0
        %1287 = vmatprep.subr.mxu0 0.0
        %1288 = vmatpush1.msra.mxu0 0.0
        %1289 = vmatprep.subr.mxu0 0.0
        %1290 = vmatpush1.msra.mxu0 0.0
        %1291 = vmatprep.subr.mxu0 0.0
        %1292 = vmatpush1.msra.mxu0 0.0
        %1293 = vmatprep.subr.mxu0 0.0
        %1294 = vmatpush1.msra.mxu0 0.0
        %1295 = vmatprep.subr.mxu0 0.0
        %1296 = vmatpush1.msra.mxu0 0.0
        %1297 = vmatprep.subr.mxu0 0.0
        %1298 = vmatpush1.msra.mxu0 0.0
        %1299 = vmatprep.subr.mxu0 0.0
        %1300 = vmatpush1.msra.mxu0 0.0
        %1301 = vmatprep.subr.mxu0 0.0
        %1302 = vmatpush1.msra.mxu0 0.0
        %1303 = vmatprep.subr.mxu0 0.0
        %1304 = vmatpush1.msra.mxu0 0.0
        %1305 = vmatprep.subr.mxu0 0.0
        %1306 = vmatpush1.msra.mxu0 0.0
        %1307 = vmatprep.subr.mxu0 0.0
        %1308 = vmatpush1.msra.mxu0 0.0
        %1309 = vmatprep.subr.mxu0 0.0
        %1310 = vmatpush1.msra.mxu0 0.0
        %1311 = vmatprep.subr.mxu0 0.0
        %1312 = vmatpush1.msra.mxu0 0.0
        %1313 = vmatprep.subr.mxu0 0.0
        %1314 = vmatpush1.msra.mxu0 0.0
        %1315 = vmatprep.subr.mxu0 0.0
        %1316 = vmatpush1.msra.mxu0 %v508
        %1317 = vmatprep.subr.mxu0 0.0
        %1318 = vmatpush2.msra.mxu0 0.0
        %1319 = vmatprep.subr.mxu0 0.0
        %1320 = vmatpush2.msra.mxu0 0.0
        %1321 = vmatprep.subr.mxu0 0.0
        %1322 = vmatpush2.msra.mxu0 0.0
        %1323 = vmatprep.subr.mxu0 0.0
        %1324 = vmatpush2.msra.mxu0 0.0
        %1325 = vmatprep.subr.mxu0 0.0
        %1326 = vmatpush2.msra.mxu0 0.0
        %1327 = vmatprep.subr.mxu0 0.0
        %1328 = vmatpush2.msra.mxu0 0.0
        %1329 = vmatprep.subr.mxu0 0.0
        %1330 = vmatpush2.msra.mxu0 0.0
        %1331 = vmatprep.subr.mxu0 0.0
        %1332 = vmatpush2.msra.mxu0 0.0
        %1333 = vmatprep.subr.mxu0 0.0
        %1334 = vmatpush2.msra.mxu0 0.0
        %1335 = vmatprep.subr.mxu0 0.0
        %1336 = vmatpush2.msra.mxu0 0.0
        %1337 = vmatprep.subr.mxu0 0.0
        %1338 = vmatpush2.msra.mxu0 0.0
        %1339 = vmatprep.subr.mxu0 0.0
        %1340 = vmatpush2.msra.mxu0 0.0
        %1341 = vmatprep.subr.mxu0 0.0
        %1342 = vmatpush2.msra.mxu0 0.0
        %1343 = vmatprep.subr.mxu0 0.0
        %1344 = vmatpush2.msra.mxu0 0.0
        %1345 = vmatprep.subr.mxu0 0.0
        %1346 = vmatpush2.msra.mxu0 0.0
        %1347 = vmatprep.subr.mxu0 0.0
        %1348 = vmatpush2.msra.mxu0 0.0
        %1349 = vmatprep.mubr.f32.mxu0 0.0
        %1350 = vmatmul.mubr.f32.gmra.mxu0 %v1262
        %v1351 = vpop.f32.mrf.mxu0
        %v1352 = vadd.f32 0.0, %v1351
        %v1353 = vpop.f32.mrf.mxu0
        %1354 = vmatprep.mubr.f32.mxu0 0.0
        %1355 = vmatmul.mubr.f32.gmra.mxu0 %v1265
        %v1356 = vpop.f32.mrf.mxu0
        %v1357 = vadd.f32 0.0, %v1356
        %v1358 = vpop.f32.mrf.mxu0
        %1359 = vmatprep.mubr.f32.mxu0 0.0
        %1360 = vmatmul.mubr.f32.gmra.mxu0 %v1268
        %v1361 = vpop.f32.mrf.mxu0
        %v1362 = vadd.f32 0.0, %v1361
        %v1363 = vpop.f32.mrf.mxu0
        %1364 = vmatprep.mubr.f32.mxu0 0.0
        %1365 = vmatmul.mubr.f32.gmra.mxu0 %v1271
        %v1366 = vpop.f32.mrf.mxu0
        %v1367 = vadd.f32 0.0, %v1366
        %v1368 = vpop.f32.mrf.mxu0
        %1369 = vmatprep.mubr.f32.mxu0 0.0
        %1370 = vmatmul.mubr.f32.gmra.mxu0 %v1274
        %v1371 = vpop.f32.mrf.mxu0
        %v1372 = vadd.f32 0.0, %v1371
        %v1373 = vpop.f32.mrf.mxu0
        %1374 = vmatprep.mubr.f32.mxu0 0.0
        %1375 = vmatmul.mubr.f32.gmra.mxu0 %v1277
        %v1376 = vpop.f32.mrf.mxu0
        %v1377 = vadd.f32 0.0, %v1376
        %v1378 = vpop.f32.mrf.mxu0
        %1379 = vmatprep.mubr.f32.mxu0 0.0
        %1380 = vmatmul.mubr.f32.gmra.mxu0 %v1280
        %v1381 = vpop.f32.mrf.mxu0
        %v1382 = vadd.f32 0.0, %v1381
        %v1383 = vpop.f32.mrf.mxu0
        %1384 = vmatprep.mubr.f32.mxu0 0.0
        %1385 = vmatmul.mubr.f32.gmra.mxu0 %v1283
        %v1386 = vpop.f32.mrf.mxu0
        %v1387 = vadd.f32 0.0, %v1386
        %v1388 = vpop.f32.mrf.mxu0
        %1389 = vdwg.mxu0
        %v1390 = vsel %vm282, %v1352, -inf
        %1391 = vmax.xlane.f32.xlu0 %v1390
        %v1392 = vpop.xlane.xlu0 %1391
        %v1393 = vsel %vm282, %v1357, -inf
        %1394 = vmax.xlane.f32.xlu0 %v1393
        %v1395 = vpop.xlane.xlu0 %1394
        %v1396 = vsel %vm282, %v1362, -inf
        %1397 = vmax.xlane.f32.xlu0 %v1396
        %v1398 = vpop.xlane.xlu0 %1397
        %v1399 = vsel %vm282, %v1367, -inf
        %1400 = vmax.xlane.f32.xlu0 %v1399
        %v1401 = vpop.xlane.xlu0 %1400
        %v1402 = vsel %vm282, %v1372, -inf
        %1403 = vmax.xlane.f32.xlu0 %v1402
        %v1404 = vpop.xlane.xlu0 %1403
        %v1405 = vsel %vm282, %v1377, -inf
        %1406 = vmax.xlane.f32.xlu0 %v1405
        %v1407 = vpop.xlane.xlu0 %1406
        %v1408 = vsel %vm282, %v1382, -inf
        %1409 = vmax.xlane.f32.xlu0 %v1408
        %v1410 = vpop.xlane.xlu0 %1409
        %v1411 = vsel %vm282, %v1387, -inf
        %1412 = vmax.xlane.f32.xlu0 %v1411
        %v1413 = vpop.xlane.xlu0 %1412
        %v1414 = vsub.f32 %v1352, %v1392
        %v1415 = vsub.f32 %v1357, %v1395
        %v1416 = vsub.f32 %v1362, %v1398
        %v1417 = vsub.f32 %v1367, %v1401
        %v1418 = vsub.f32 %v1372, %v1404
        %v1419 = vsub.f32 %v1377, %v1407
        %v1420 = vsub.f32 %v1382, %v1410
        %v1421 = vsub.f32 %v1387, %v1413
        %v1422 = vmul.f32 %v1414, 1.442695
        %v1423 = vpow.pop %v1422
        %v1424 = vmul.f32 %v1415, 1.442695
        %v1425 = vpow.pop %v1424
        %v1426 = vmul.f32 %v1416, 1.442695
        %v1427 = vpow.pop %v1426
        %v1428 = vmul.f32 %v1417, 1.442695
        %v1429 = vpow.pop %v1428
        %v1430 = vmul.f32 %v1418, 1.442695
        %v1431 = vpow.pop %v1430
        %v1432 = vmul.f32 %v1419, 1.442695
        %v1433 = vpow.pop %v1432
        %v1434 = vmul.f32 %v1420, 1.442695
        %v1435 = vpow.pop %v1434
        %v1436 = vmul.f32 %v1421, 1.442695
        %v1437 = vpow.pop %v1436
        %v1438 = vsel %vm282, %v1423, 0.0
        %1439 = vadd.xlane.f32.xlu0 %v1438
        %v1440 = vpop.xlane.xlu0 %1439
        %v1441 = vsel %vm282, %v1425, 0.0
        %1442 = vadd.xlane.f32.xlu0 %v1441
        %v1443 = vpop.xlane.xlu0 %1442
        %v1444 = vsel %vm282, %v1427, 0.0
        %1445 = vadd.xlane.f32.xlu0 %v1444
        %v1446 = vpop.xlane.xlu0 %1445
        %v1447 = vsel %vm282, %v1429, 0.0
        %1448 = vadd.xlane.f32.xlu0 %v1447
        %v1449 = vpop.xlane.xlu0 %1448
        %v1450 = vsel %vm282, %v1431, 0.0
        %1451 = vadd.xlane.f32.xlu0 %v1450
        %v1452 = vpop.xlane.xlu0 %1451
        %v1453 = vsel %vm282, %v1433, 0.0
        %1454 = vadd.xlane.f32.xlu0 %v1453
        %v1455 = vpop.xlane.xlu0 %1454
        %v1456 = vsel %vm282, %v1435, 0.0
        %1457 = vadd.xlane.f32.xlu0 %v1456
        %v1458 = vpop.xlane.xlu0 %1457
        %v1459 = vsel %vm282, %v1437, 0.0
        %1460 = vadd.xlane.f32.xlu0 %v1459
        %v1461 = vpop.xlane.xlu0 %1460
        %v1462 = vrcp.pop %v1440
        %v1463 = vrcp.pop %v1443
        %v1464 = vrcp.pop %v1446
        %v1465 = vrcp.pop %v1449
        %v1466 = vrcp.pop %v1452
        %v1467 = vrcp.pop %v1455
        %v1468 = vrcp.pop %v1458
        %v1469 = vrcp.pop %v1461
        %v1470 = vmul.f32 %v1423, %v1462
        %v1471 = vmul.f32 %v1425, %v1463
        %v1472 = vmul.f32 %v1427, %v1464
        %v1473 = vmul.f32 %v1429, %v1465
        %v1474 = vmul.f32 %v1431, %v1466
        %v1475 = vmul.f32 %v1433, %v1467
        %v1476 = vmul.f32 %v1435, %v1468
        %v1477 = vmul.f32 %v1437, %v1469
        %v1479 = vsel %vm282, %v528, 0
        %v1482 = vsel %vm282, %v1470, 0
        %v1485 = vsel %vm282, %v1471, 0
        %v1488 = vsel %vm282, %v1472, 0
        %v1491 = vsel %vm282, %v1473, 0
        %v1494 = vsel %vm282, %v1474, 0
        %v1497 = vsel %vm282, %v1475, 0
        %v1500 = vsel %vm282, %v1476, 0
        %v1503 = vsel %vm282, %v1477, 0
        %1505 = vmatprep.subr.mxu0 0.0
        %1506 = vmatpush1.xpose.msra.mxu0 0.0
        %1507 = vmatprep.subr.mxu0 0.0
        %1508 = vmatpush1.xpose.msra.mxu0 0.0
        %1509 = vmatprep.subr.mxu0 0.0
        %1510 = vmatpush1.xpose.msra.mxu0 0.0
        %1511 = vmatprep.subr.mxu0 0.0
        %1512 = vmatpush1.xpose.msra.mxu0 0.0
        %1513 = vmatprep.subr.mxu0 0.0
        %1514 = vmatpush1.xpose.msra.mxu0 0.0
        %1515 = vmatprep.subr.mxu0 0.0
        %1516 = vmatpush1.xpose.msra.mxu0 0.0
        %1517 = vmatprep.subr.mxu0 0.0
        %1518 = vmatpush1.xpose.msra.mxu0 0.0
        %1519 = vmatprep.subr.mxu0 0.0
        %1520 = vmatpush1.xpose.msra.mxu0 0.0
        %1521 = vmatprep.subr.mxu0 0.0
        %1522 = vmatpush1.xpose.msra.mxu0 %v1503
        %1523 = vmatprep.subr.mxu0 0.0
        %1524 = vmatpush1.xpose.msra.mxu0 %v1500
        %1525 = vmatprep.subr.mxu0 0.0
        %1526 = vmatpush1.xpose.msra.mxu0 %v1497
        %1527 = vmatprep.subr.mxu0 0.0
        %1528 = vmatpush1.xpose.msra.mxu0 %v1494
        %1529 = vmatprep.subr.mxu0 0.0
        %1530 = vmatpush1.xpose.msra.mxu0 %v1491
        %1531 = vmatprep.subr.mxu0 0.0
        %1532 = vmatpush1.xpose.msra.mxu0 %v1488
        %1533 = vmatprep.subr.mxu0 0.0
        %1534 = vmatpush1.xpose.msra.mxu0 %v1485
        %1535 = vmatprep.subr.mxu0 0.0
        %1536 = vmatpush1.xpose.msra.mxu0 %v1482
        %1537 = vmatprep.subr.mxu0 0.0
        %1538 = vmatpush2.xpose.msra.mxu0 0.0
        %1539 = vmatprep.subr.mxu0 0.0
        %1540 = vmatpush2.xpose.msra.mxu0 0.0
        %1541 = vmatprep.subr.mxu0 0.0
        %1542 = vmatpush2.xpose.msra.mxu0 0.0
        %1543 = vmatprep.subr.mxu0 0.0
        %1544 = vmatpush2.xpose.msra.mxu0 0.0
        %1545 = vmatprep.subr.mxu0 0.0
        %1546 = vmatpush2.xpose.msra.mxu0 0.0
        %1547 = vmatprep.subr.mxu0 0.0
        %1548 = vmatpush2.xpose.msra.mxu0 0.0
        %1549 = vmatprep.subr.mxu0 0.0
        %1550 = vmatpush2.xpose.msra.mxu0 0.0
        %1551 = vmatprep.subr.mxu0 0.0
        %1552 = vmatpush2.xpose.msra.mxu0 0.0
        %1553 = vmatprep.subr.mxu0 0.0
        %1554 = vmatpush2.xpose.msra.mxu0 0.0
        %1555 = vmatprep.subr.mxu0 0.0
        %1556 = vmatpush2.xpose.msra.mxu0 0.0
        %1557 = vmatprep.subr.mxu0 0.0
        %1558 = vmatpush2.xpose.msra.mxu0 0.0
        %1559 = vmatprep.subr.mxu0 0.0
        %1560 = vmatpush2.xpose.msra.mxu0 0.0
        %1561 = vmatprep.subr.mxu0 0.0
        %1562 = vmatpush2.xpose.msra.mxu0 0.0
        %1563 = vmatprep.subr.mxu0 0.0
        %1564 = vmatpush2.xpose.msra.mxu0 0.0
        %1565 = vmatprep.subr.mxu0 0.0
        %1566 = vmatpush2.xpose.msra.mxu0 0.0
        %1567 = vmatprep.subr.mxu0 0.0
        %1568 = vmatpush2.xpose.msra.mxu0 0.0
        %1569 = vmatprep.mubr.f32.mxu0 0.0
        %1570 = vmatmul.mubr.f32.gmra.mxu0 %v1479
        %v1571 = vpop.f32.mrf.mxu0
        %v1572 = vadd.f32 0.0, %v1571
        %v1573 = vpop.f32.mrf.mxu0
        %1574 = vdwg.mxu0
        %1575 = vxpose.xlu0.b32.start [1/16] %v493, 128
        %1576 = vxpose.xlu0.b32.cont [2/16] 0.0, 128
        %1577 = vxpose.xlu0.b32.cont [3/16] 0.0, 128
        %1578 = vxpose.xlu0.b32.cont [4/16] 0.0, 128
        %1579 = vxpose.xlu0.b32.cont [5/16] 0.0, 128
        %1580 = vxpose.xlu0.b32.cont [6/16] 0.0, 128
        %1581 = vxpose.xlu0.b32.cont [7/16] 0.0, 128
        %1582 = vxpose.xlu0.b32.cont [8/16] 0.0, 128
        %1583 = vxpose.xlu0.b32.cont [9/16] 0.0, 128
        %1584 = vxpose.xlu0.b32.cont [10/16] 0.0, 128
        %1585 = vxpose.xlu0.b32.cont [11/16] 0.0, 128
        %1586 = vxpose.xlu0.b32.cont [12/16] 0.0, 128
        %1587 = vxpose.xlu0.b32.cont [13/16] 0.0, 128
        %1588 = vxpose.xlu0.b32.cont [14/16] 0.0, 128
        %1589 = vxpose.xlu0.b32.cont [15/16] 0.0, 128
        %1590 = vxpose.xlu0.b32.end [16/16] 0.0, 128
        %v1591 = vpop.trf.xlu0
        %v1592 = vpop.trf.xlu0
        %v1593 = vpop.trf.xlu0
        %v1594 = vpop.trf.xlu0
        %v1595 = vpop.trf.xlu0
        %v1596 = vpop.trf.xlu0
        %v1597 = vpop.trf.xlu0
        %v1598 = vpop.trf.xlu0
        %v1599 = vpop.trf.xlu0
        %v1600 = vpop.trf.xlu0
        %v1601 = vpop.trf.xlu0
        %v1602 = vpop.trf.xlu0
        %v1603 = vpop.trf.xlu0
        %v1604 = vpop.trf.xlu0
        %v1605 = vpop.trf.xlu0
        %v1606 = vpop.trf.xlu0
        %v1608 = vsel %vm568, %v1591, 0
        %v1611 = vsel %vm568, %v1592, 0
        %v1614 = vsel %vm568, %v1593, 0
        %v1617 = vsel %vm568, %v1594, 0
        %v1620 = vsel %vm568, %v1595, 0
        %v1623 = vsel %vm568, %v1596, 0
        %v1626 = vsel %vm568, %v1597, 0
        %v1629 = vsel %vm568, %v1598, 0
        %1631 = vmatprep.subr.mxu0 0.0
        %1632 = vmatpush1.msra.mxu0 0.0
        %1633 = vmatprep.subr.mxu0 0.0
        %1634 = vmatpush1.msra.mxu0 0.0
        %1635 = vmatprep.subr.mxu0 0.0
        %1636 = vmatpush1.msra.mxu0 0.0
        %1637 = vmatprep.subr.mxu0 0.0
        %1638 = vmatpush1.msra.mxu0 0.0
        %1639 = vmatprep.subr.mxu0 0.0
        %1640 = vmatpush1.msra.mxu0 0.0
        %1641 = vmatprep.subr.mxu0 0.0
        %1642 = vmatpush1.msra.mxu0 0.0
        %1643 = vmatprep.subr.mxu0 0.0
        %1644 = vmatpush1.msra.mxu0 0.0
        %1645 = vmatprep.subr.mxu0 0.0
        %1646 = vmatpush1.msra.mxu0 0.0
        %1647 = vmatprep.subr.mxu0 0.0
        %1648 = vmatpush1.msra.mxu0 0.0
        %1649 = vmatprep.subr.mxu0 0.0
        %1650 = vmatpush1.msra.mxu0 0.0
        %1651 = vmatprep.subr.mxu0 0.0
        %1652 = vmatpush1.msra.mxu0 0.0
        %1653 = vmatprep.subr.mxu0 0.0
        %1654 = vmatpush1.msra.mxu0 0.0
        %1655 = vmatprep.subr.mxu0 0.0
        %1656 = vmatpush1.msra.mxu0 0.0
        %1657 = vmatprep.subr.mxu0 0.0
        %1658 = vmatpush1.msra.mxu0 0.0
        %1659 = vmatprep.subr.mxu0 0.0
        %1660 = vmatpush1.msra.mxu0 0.0
        %1661 = vmatprep.subr.mxu0 0.0
        %1662 = vmatpush1.msra.mxu0 %v513
        %1663 = vmatprep.subr.mxu0 0.0
        %1664 = vmatpush2.msra.mxu0 0.0
        %1665 = vmatprep.subr.mxu0 0.0
        %1666 = vmatpush2.msra.mxu0 0.0
        %1667 = vmatprep.subr.mxu0 0.0
        %1668 = vmatpush2.msra.mxu0 0.0
        %1669 = vmatprep.subr.mxu0 0.0
        %1670 = vmatpush2.msra.mxu0 0.0
        %1671 = vmatprep.subr.mxu0 0.0
        %1672 = vmatpush2.msra.mxu0 0.0
        %1673 = vmatprep.subr.mxu0 0.0
        %1674 = vmatpush2.msra.mxu0 0.0
        %1675 = vmatprep.subr.mxu0 0.0
        %1676 = vmatpush2.msra.mxu0 0.0
        %1677 = vmatprep.subr.mxu0 0.0
        %1678 = vmatpush2.msra.mxu0 0.0
        %1679 = vmatprep.subr.mxu0 0.0
        %1680 = vmatpush2.msra.mxu0 0.0
        %1681 = vmatprep.subr.mxu0 0.0
        %1682 = vmatpush2.msra.mxu0 0.0
        %1683 = vmatprep.subr.mxu0 0.0
        %1684 = vmatpush2.msra.mxu0 0.0
        %1685 = vmatprep.subr.mxu0 0.0
        %1686 = vmatpush2.msra.mxu0 0.0
        %1687 = vmatprep.subr.mxu0 0.0
        %1688 = vmatpush2.msra.mxu0 0.0
        %1689 = vmatprep.subr.mxu0 0.0
        %1690 = vmatpush2.msra.mxu0 0.0
        %1691 = vmatprep.subr.mxu0 0.0
        %1692 = vmatpush2.msra.mxu0 0.0
        %1693 = vmatprep.subr.mxu0 0.0
        %1694 = vmatpush2.msra.mxu0 0.0
        %1695 = vmatprep.mubr.f32.mxu0 0.0
        %1696 = vmatmul.mubr.f32.gmra.mxu0 %v1608
        %v1697 = vpop.f32.mrf.mxu0
        %v1698 = vadd.f32 0.0, %v1697
        %v1699 = vpop.f32.mrf.mxu0
        %1700 = vmatprep.mubr.f32.mxu0 0.0
        %1701 = vmatmul.mubr.f32.gmra.mxu0 %v1611
        %v1702 = vpop.f32.mrf.mxu0
        %v1703 = vadd.f32 0.0, %v1702
        %v1704 = vpop.f32.mrf.mxu0
        %1705 = vmatprep.mubr.f32.mxu0 0.0
        %1706 = vmatmul.mubr.f32.gmra.mxu0 %v1614
        %v1707 = vpop.f32.mrf.mxu0
        %v1708 = vadd.f32 0.0, %v1707
        %v1709 = vpop.f32.mrf.mxu0
        %1710 = vmatprep.mubr.f32.mxu0 0.0
        %1711 = vmatmul.mubr.f32.gmra.mxu0 %v1617
        %v1712 = vpop.f32.mrf.mxu0
        %v1713 = vadd.f32 0.0, %v1712
        %v1714 = vpop.f32.mrf.mxu0
        %1715 = vmatprep.mubr.f32.mxu0 0.0
        %1716 = vmatmul.mubr.f32.gmra.mxu0 %v1620
        %v1717 = vpop.f32.mrf.mxu0
        %v1718 = vadd.f32 0.0, %v1717
        %v1719 = vpop.f32.mrf.mxu0
        %1720 = vmatprep.mubr.f32.mxu0 0.0
        %1721 = vmatmul.mubr.f32.gmra.mxu0 %v1623
        %v1722 = vpop.f32.mrf.mxu0
        %v1723 = vadd.f32 0.0, %v1722
        %v1724 = vpop.f32.mrf.mxu0
        %1725 = vmatprep.mubr.f32.mxu0 0.0
        %1726 = vmatmul.mubr.f32.gmra.mxu0 %v1626
        %v1727 = vpop.f32.mrf.mxu0
        %v1728 = vadd.f32 0.0, %v1727
        %v1729 = vpop.f32.mrf.mxu0
        %1730 = vmatprep.mubr.f32.mxu0 0.0
        %1731 = vmatmul.mubr.f32.gmra.mxu0 %v1629
        %v1732 = vpop.f32.mrf.mxu0
        %v1733 = vadd.f32 0.0, %v1732
        %v1734 = vpop.f32.mrf.mxu0
        %1735 = vdwg.mxu0
        %v1736 = vsel %vm282, %v1698, -inf
        %1737 = vmax.xlane.f32.xlu0 %v1736
        %v1738 = vpop.xlane.xlu0 %1737
        %v1739 = vsel %vm282, %v1703, -inf
        %1740 = vmax.xlane.f32.xlu0 %v1739
        %v1741 = vpop.xlane.xlu0 %1740
        %v1742 = vsel %vm282, %v1708, -inf
        %1743 = vmax.xlane.f32.xlu0 %v1742
        %v1744 = vpop.xlane.xlu0 %1743
        %v1745 = vsel %vm282, %v1713, -inf
        %1746 = vmax.xlane.f32.xlu0 %v1745
        %v1747 = vpop.xlane.xlu0 %1746
        %v1748 = vsel %vm282, %v1718, -inf
        %1749 = vmax.xlane.f32.xlu0 %v1748
        %v1750 = vpop.xlane.xlu0 %1749
        %v1751 = vsel %vm282, %v1723, -inf
        %1752 = vmax.xlane.f32.xlu0 %v1751
        %v1753 = vpop.xlane.xlu0 %1752
        %v1754 = vsel %vm282, %v1728, -inf
        %1755 = vmax.xlane.f32.xlu0 %v1754
        %v1756 = vpop.xlane.xlu0 %1755
        %v1757 = vsel %vm282, %v1733, -inf
        %1758 = vmax.xlane.f32.xlu0 %v1757
        %v1759 = vpop.xlane.xlu0 %1758
        %v1760 = vsub.f32 %v1698, %v1738
        %v1761 = vsub.f32 %v1703, %v1741
        %v1762 = vsub.f32 %v1708, %v1744
        %v1763 = vsub.f32 %v1713, %v1747
        %v1764 = vsub.f32 %v1718, %v1750
        %v1765 = vsub.f32 %v1723, %v1753
        %v1766 = vsub.f32 %v1728, %v1756
        %v1767 = vsub.f32 %v1733, %v1759
        %v1768 = vmul.f32 %v1760, 1.442695
        %v1769 = vpow.pop %v1768
        %v1770 = vmul.f32 %v1761, 1.442695
        %v1771 = vpow.pop %v1770
        %v1772 = vmul.f32 %v1762, 1.442695
        %v1773 = vpow.pop %v1772
        %v1774 = vmul.f32 %v1763, 1.442695
        %v1775 = vpow.pop %v1774
        %v1776 = vmul.f32 %v1764, 1.442695
        %v1777 = vpow.pop %v1776
        %v1778 = vmul.f32 %v1765, 1.442695
        %v1779 = vpow.pop %v1778
        %v1780 = vmul.f32 %v1766, 1.442695
        %v1781 = vpow.pop %v1780
        %v1782 = vmul.f32 %v1767, 1.442695
        %v1783 = vpow.pop %v1782
        %v1784 = vsel %vm282, %v1769, 0.0
        %1785 = vadd.xlane.f32.xlu0 %v1784
        %v1786 = vpop.xlane.xlu0 %1785
        %v1787 = vsel %vm282, %v1771, 0.0
        %1788 = vadd.xlane.f32.xlu0 %v1787
        %v1789 = vpop.xlane.xlu0 %1788
        %v1790 = vsel %vm282, %v1773, 0.0
        %1791 = vadd.xlane.f32.xlu0 %v1790
        %v1792 = vpop.xlane.xlu0 %1791
        %v1793 = vsel %vm282, %v1775, 0.0
        %1794 = vadd.xlane.f32.xlu0 %v1793
        %v1795 = vpop.xlane.xlu0 %1794
        %v1796 = vsel %vm282, %v1777, 0.0
        %1797 = vadd.xlane.f32.xlu0 %v1796
        %v1798 = vpop.xlane.xlu0 %1797
        %v1799 = vsel %vm282, %v1779, 0.0
        %1800 = vadd.xlane.f32.xlu0 %v1799
        %v1801 = vpop.xlane.xlu0 %1800
        %v1802 = vsel %vm282, %v1781, 0.0
        %1803 = vadd.xlane.f32.xlu0 %v1802
        %v1804 = vpop.xlane.xlu0 %1803
        %v1805 = vsel %vm282, %v1783, 0.0
        %1806 = vadd.xlane.f32.xlu0 %v1805
        %v1807 = vpop.xlane.xlu0 %1806
        %v1808 = vrcp.pop %v1786
        %v1809 = vrcp.pop %v1789
        %v1810 = vrcp.pop %v1792
        %v1811 = vrcp.pop %v1795
        %v1812 = vrcp.pop %v1798
        %v1813 = vrcp.pop %v1801
        %v1814 = vrcp.pop %v1804
        %v1815 = vrcp.pop %v1807
        %v1816 = vmul.f32 %v1769, %v1808
        %v1817 = vmul.f32 %v1771, %v1809
        %v1818 = vmul.f32 %v1773, %v1810
        %v1819 = vmul.f32 %v1775, %v1811
        %v1820 = vmul.f32 %v1777, %v1812
        %v1821 = vmul.f32 %v1779, %v1813
        %v1822 = vmul.f32 %v1781, %v1814
        %v1823 = vmul.f32 %v1783, %v1815
        %v1825 = vsel %vm282, %v533, 0
        %v1828 = vsel %vm282, %v1816, 0
        %v1831 = vsel %vm282, %v1817, 0
        %v1834 = vsel %vm282, %v1818, 0
        %v1837 = vsel %vm282, %v1819, 0
        %v1840 = vsel %vm282, %v1820, 0
        %v1843 = vsel %vm282, %v1821, 0
        %v1846 = vsel %vm282, %v1822, 0
        %v1849 = vsel %vm282, %v1823, 0
        %1851 = vmatprep.subr.mxu0 0.0
        %1852 = vmatpush1.xpose.msra.mxu0 0.0
        %1853 = vmatprep.subr.mxu0 0.0
        %1854 = vmatpush1.xpose.msra.mxu0 0.0
        %1855 = vmatprep.subr.mxu0 0.0
        %1856 = vmatpush1.xpose.msra.mxu0 0.0
        %1857 = vmatprep.subr.mxu0 0.0
        %1858 = vmatpush1.xpose.msra.mxu0 0.0
        %1859 = vmatprep.subr.mxu0 0.0
        %1860 = vmatpush1.xpose.msra.mxu0 0.0
        %1861 = vmatprep.subr.mxu0 0.0
        %1862 = vmatpush1.xpose.msra.mxu0 0.0
        %1863 = vmatprep.subr.mxu0 0.0
        %1864 = vmatpush1.xpose.msra.mxu0 0.0
        %1865 = vmatprep.subr.mxu0 0.0
        %1866 = vmatpush1.xpose.msra.mxu0 0.0
        %1867 = vmatprep.subr.mxu0 0.0
        %1868 = vmatpush1.xpose.msra.mxu0 %v1849
        %1869 = vmatprep.subr.mxu0 0.0
        %1870 = vmatpush1.xpose.msra.mxu0 %v1846
        %1871 = vmatprep.subr.mxu0 0.0
        %1872 = vmatpush1.xpose.msra.mxu0 %v1843
        %1873 = vmatprep.subr.mxu0 0.0
        %1874 = vmatpush1.xpose.msra.mxu0 %v1840
        %1875 = vmatprep.subr.mxu0 0.0
        %1876 = vmatpush1.xpose.msra.mxu0 %v1837
        %1877 = vmatprep.subr.mxu0 0.0
        %1878 = vmatpush1.xpose.msra.mxu0 %v1834
        %1879 = vmatprep.subr.mxu0 0.0
        %1880 = vmatpush1.xpose.msra.mxu0 %v1831
        %1881 = vmatprep.subr.mxu0 0.0
        %1882 = vmatpush1.xpose.msra.mxu0 %v1828
        %1883 = vmatprep.subr.mxu0 0.0
        %1884 = vmatpush2.xpose.msra.mxu0 0.0
        %1885 = vmatprep.subr.mxu0 0.0
        %1886 = vmatpush2.xpose.msra.mxu0 0.0
        %1887 = vmatprep.subr.mxu0 0.0
        %1888 = vmatpush2.xpose.msra.mxu0 0.0
        %1889 = vmatprep.subr.mxu0 0.0
        %1890 = vmatpush2.xpose.msra.mxu0 0.0
        %1891 = vmatprep.subr.mxu0 0.0
        %1892 = vmatpush2.xpose.msra.mxu0 0.0
        %1893 = vmatprep.subr.mxu0 0.0
        %1894 = vmatpush2.xpose.msra.mxu0 0.0
        %1895 = vmatprep.subr.mxu0 0.0
        %1896 = vmatpush2.xpose.msra.mxu0 0.0
        %1897 = vmatprep.subr.mxu0 0.0
        %1898 = vmatpush2.xpose.msra.mxu0 0.0
        %1899 = vmatprep.subr.mxu0 0.0
        %1900 = vmatpush2.xpose.msra.mxu0 0.0
        %1901 = vmatprep.subr.mxu0 0.0
        %1902 = vmatpush2.xpose.msra.mxu0 0.0
        %1903 = vmatprep.subr.mxu0 0.0
        %1904 = vmatpush2.xpose.msra.mxu0 0.0
        %1905 = vmatprep.subr.mxu0 0.0
        %1906 = vmatpush2.xpose.msra.mxu0 0.0
        %1907 = vmatprep.subr.mxu0 0.0
        %1908 = vmatpush2.xpose.msra.mxu0 0.0
        %1909 = vmatprep.subr.mxu0 0.0
        %1910 = vmatpush2.xpose.msra.mxu0 0.0
        %1911 = vmatprep.subr.mxu0 0.0
        %1912 = vmatpush2.xpose.msra.mxu0 0.0
        %1913 = vmatprep.subr.mxu0 0.0
        %1914 = vmatpush2.xpose.msra.mxu0 0.0
        %1915 = vmatprep.mubr.f32.mxu0 0.0
        %1916 = vmatmul.mubr.f32.gmra.mxu0 %v1825
        %v1917 = vpop.f32.mrf.mxu0
        %v1918 = vadd.f32 0.0, %v1917
        %v1919 = vpop.f32.mrf.mxu0
        %1920 = vdwg.mxu0
        %1922 = vset.pattern.permute.xlu0 0
        %1923 = vperm.xlu0 %1922, %v262
        %v1924 = vpop.permute.xlu0 %1923
        %1927 = vset.pattern.permute.xlu0 0
        %1928 = vperm.xlu0 %1927, %v263
        %v1929 = vpop.permute.xlu0 %1928
        %1932 = vset.pattern.permute.xlu0 0
        %1933 = vperm.xlu0 %1932, %v264
        %v1934 = vpop.permute.xlu0 %1933
        %1937 = vset.pattern.permute.xlu0 0
        %1938 = vperm.xlu0 %1937, %v265
        %v1939 = vpop.permute.xlu0 %1938
        %v1942 = vsel %vm374, %v278, 0
        %v1945 = vsel %vm374, %v279, 0
        %v1948 = vsel %vm374, %v280, 0
        %v1951 = vsel %vm374, %v281, 0
        %1953 = vmatprep.subr.mxu0 0.0
        %1954 = vmatpush1.msra.mxu0 0.0
        %1955 = vmatprep.subr.mxu0 0.0
        %1956 = vmatpush1.msra.mxu0 0.0
        %1957 = vmatprep.subr.mxu0 0.0
        %1958 = vmatpush1.msra.mxu0 0.0
        %1959 = vmatprep.subr.mxu0 0.0
        %1960 = vmatpush1.msra.mxu0 0.0
        %1961 = vmatprep.subr.mxu0 0.0
        %1962 = vmatpush1.msra.mxu0 0.0
        %1963 = vmatprep.subr.mxu0 0.0
        %1964 = vmatpush1.msra.mxu0 0.0
        %1965 = vmatprep.subr.mxu0 0.0
        %1966 = vmatpush1.msra.mxu0 0.0
        %1967 = vmatprep.subr.mxu0 0.0
        %1968 = vmatpush1.msra.mxu0 0.0
        %1969 = vmatprep.subr.mxu0 0.0
        %1970 = vmatpush1.msra.mxu0 0.0
        %1971 = vmatprep.subr.mxu0 0.0
        %1972 = vmatpush1.msra.mxu0 0.0
        %1973 = vmatprep.subr.mxu0 0.0
        %1974 = vmatpush1.msra.mxu0 0.0
        %1975 = vmatprep.subr.mxu0 0.0
        %1976 = vmatpush1.msra.mxu0 0.0
        %1977 = vmatprep.subr.mxu0 0.0
        %1978 = vmatpush1.msra.mxu0 %v1918
        %1979 = vmatprep.subr.mxu0 0.0
        %1980 = vmatpush1.msra.mxu0 %v1572
        %1981 = vmatprep.subr.mxu0 0.0
        %1982 = vmatpush1.msra.mxu0 %v1226
        %1983 = vmatprep.subr.mxu0 0.0
        %1984 = vmatpush1.msra.mxu0 %v880
        %1985 = vmatprep.subr.mxu0 0.0
        %1986 = vmatpush2.msra.mxu0 0.0
        %1987 = vmatprep.subr.mxu0 0.0
        %1988 = vmatpush2.msra.mxu0 0.0
        %1989 = vmatprep.subr.mxu0 0.0
        %1990 = vmatpush2.msra.mxu0 0.0
        %1991 = vmatprep.subr.mxu0 0.0
        %1992 = vmatpush2.msra.mxu0 0.0
        %1993 = vmatprep.subr.mxu0 0.0
        %1994 = vmatpush2.msra.mxu0 0.0
        %1995 = vmatprep.subr.mxu0 0.0
        %1996 = vmatpush2.msra.mxu0 0.0
        %1997 = vmatprep.subr.mxu0 0.0
        %1998 = vmatpush2.msra.mxu0 0.0
        %1999 = vmatprep.subr.mxu0 0.0
        %2000 = vmatpush2.msra.mxu0 0.0
        %2001 = vmatprep.subr.mxu0 0.0
        %2002 = vmatpush2.msra.mxu0 0.0
        %2003 = vmatprep.subr.mxu0 0.0
        %2004 = vmatpush2.msra.mxu0 0.0
        %2005 = vmatprep.subr.mxu0 0.0
        %2006 = vmatpush2.msra.mxu0 0.0
        %2007 = vmatprep.subr.mxu0 0.0
        %2008 = vmatpush2.msra.mxu0 0.0
        %2009 = vmatprep.subr.mxu0 0.0
        %2010 = vmatpush2.msra.mxu0 0.0
        %2011 = vmatprep.subr.mxu0 0.0
        %2012 = vmatpush2.msra.mxu0 0.0
        %2013 = vmatprep.subr.mxu0 0.0
        %2014 = vmatpush2.msra.mxu0 0.0
        %2015 = vmatprep.subr.mxu0 0.0
        %2016 = vmatpush2.msra.mxu0 0.0
        %2017 = vmatprep.mubr.f32.mxu0 0.0
        %2018 = vmatmul.mubr.f32.gmra.mxu0 %v1942
        %v2019 = vpop.f32.mrf.mxu0
        %v2020 = vadd.f32 %v1924, %v2019
        %v2021 = vpop.f32.mrf.mxu0
        %2022 = vmatprep.mubr.f32.mxu0 0.0
        %2023 = vmatmul.mubr.f32.gmra.mxu0 %v1945
        %v2024 = vpop.f32.mrf.mxu0
        %v2025 = vadd.f32 %v1929, %v2024
        %v2026 = vpop.f32.mrf.mxu0
        %2027 = vmatprep.mubr.f32.mxu0 0.0
        %2028 = vmatmul.mubr.f32.gmra.mxu0 %v1948
        %v2029 = vpop.f32.mrf.mxu0
        %v2030 = vadd.f32 %v1934, %v2029
        %v2031 = vpop.f32.mrf.mxu0
        %2032 = vmatprep.mubr.f32.mxu0 0.0
        %2033 = vmatmul.mubr.f32.gmra.mxu0 %v1951
        %v2034 = vpop.f32.mrf.mxu0
        %v2035 = vadd.f32 %v1939, %v2034
        %v2036 = vpop.f32.mrf.mxu0
        %2037 = vdwg.mxu0
        %v2038 = vadd.f32 %v2020, %v250
        %v2039 = vadd.f32 %v2025, %v251
        %v2040 = vadd.f32 %v2030, %v252
        %v2041 = vadd.f32 %v2035, %v253
        %2042 = vst.msk [vmem:[%s244] sm:$0xff] %vm282, %v2038
        %2043 = vst.msk [vmem:[%s244 + $0x8] sm:$0xff] %vm282, %v2039
        %2044 = vst.msk [vmem:[%s244 + $0x10] sm:$0xff] %vm282, %v2040
        %2045 = vst.msk [vmem:[%s244 + $0x18] sm:$0xff] %vm282, %v2041
        %s2046 = sand.u32 %s159, 1
        %s2047 = scalar_lea.sflag [#allocation3], %s2046
        %s2048 = sand.u32 %s159, 1
        %s2049 = smul.addr %s2048, 32
        %s2050 = scalar_lea.vmem [#allocation2], %s2049
        // Predicated region
        $region45: #{tpu_custom_call.1} parent=43 // pred_check
          %p2051 = pneg %p169
        $region46: #{tpu_custom_call.1} parent=43 // pred_check_branch
          %2053 = sbr.rel (%p2051) target = $region48
        $region47: #{tpu_custom_call.1} parent=43 // pred_region
          %s2055 = ssub.s32 512, 512
          %2056 = vsyncadd %s2047, %s2055
          %s2057 = smul.addr %s20, 4
          %s2058 = smul.addr %s2057, 128
          %s2059 = scalar_lea.hbm %s6, %s2058
          %s2060 = sshll.u32 %s2050, 4
          %s2061 = int_to_ptr.vmem [resolvable:$true] %s2060
          %2066 = dma.vmem_to_hbm [thread:$0]  %s2061, 512, %s2059, %s2047, 128, 128, 8
        $region48: #{tpu_custom_call.1} parent=43 // pred_fallthru
          _
      $region44: #{tpu_custom_call.1} parent=5 // pred_fallthru
        _
      %p2067 = scmp.le.s32.totalorder 2, %s15
      // Predicated region
      $region49: #{tpu_custom_call.1} parent=5 // pred_check
        %p2068 = pneg %p2067
      $region50: #{tpu_custom_call.1} parent=5 // pred_check_branch
        %2070 = sbr.rel (%p2068) target = $region52
      $region51: #{tpu_custom_call.1} parent=5 // pred_region
        %s2071 = ssub.s32 %s15, 2
        // Predicated region
        $region53: #{tpu_custom_call.1} parent=51 // pred_check
          %p2072 = pneg %p175
        $region54: #{tpu_custom_call.1} parent=51 // pred_check_branch
          %2074 = sbr.rel (%p2072) target = $region56
        $region55: #{tpu_custom_call.1} parent=51 // pred_region
          %s2075 = sand.u32 %s160, 1
          %s2076 = scalar_lea.sflag [#allocation3], %s2075
          %s2077 = sand.u32 %s160, 1
          %s2078 = smul.addr %s2077, 32
          %s2079 = scalar_lea.vmem [#allocation2], %s2078
          %2080 = dma.done %s2076, 512
        $region56: #{tpu_custom_call.1} parent=51 // pred_fallthru
          _
      $region52: #{tpu_custom_call.1} parent=5 // pred_fallthru
        _
    $region6: #{tpu_custom_call.1} parent=1 // loop_footer
      %s19 = sadd.s32 1, %s15
    $region7: #{tpu_custom_call.1} parent=1 // loop_footer_branch
      %14 = sbr.rel target = $region3
    $region8: #{tpu_custom_call.1} parent=1 // loop_exit
      _
    %2081 = vsyncpa [#allocation3], 1
    %s2082 = scalar_lea.sflag [#allocation3], 1
    %2083 = vsyncpa %s2082, 1

</llo_original>
